<compile_context>
chip_gen: v7x
topology: tpu7x:2x2x1
jax: 0.10.0
libtpu: 0.0.40
codegen_flags: <defaults>
</compile_context>

<pallas_src>
import math
import functools

import jax
import jax.numpy as jnp
from jax.experimental import pallas as pl
from jax.experimental.pallas import tpu as pltpu


def _self_attention_kernel(xq_ref, xkv_ref, wq_ref, bq_ref, wk_ref, bk_ref,
                           wv_ref, bv_ref, wo_ref, bo_ref, o_ref,
                           k_sc, v_sc, *, n_heads, d_head, q_tile, causal):
    H, dh, tq = n_heads, d_head, q_tile
    S = xkv_ref.shape[1]
    D = H * dh
    qi = pl.program_id(1)

    # ---- K/V projection: once per batch element (q-tile 0), cached head-major
    # in VMEM scratch and reused by every query tile of this batch element. ----
    @pl.when(qi == 0)
    def _():
        xkv = xkv_ref[0]                                                # (S, D)
        k = jnp.dot(xkv, wk_ref[...],
                    preferred_element_type=jnp.float32) + bk_ref[0]     # (S, D)
        v = jnp.dot(xkv, wv_ref[...],
                    preferred_element_type=jnp.float32) + bv_ref[0]     # (S, D)
        k = k.astype(k_sc.dtype).reshape(S, H, dh)
        v = v.astype(v_sc.dtype).reshape(S, H, dh)
        k_sc[...] = jnp.swapaxes(k, 0, 1)                               # (H, S, dh)
        v_sc[...] = jnp.swapaxes(v, 0, 1)                               # (H, S, dh)

    # ---- Q projection for this query tile; softmax scale folded into q. ----
    xq = xq_ref[0]                                                      # (tq, D)
    q = jnp.dot(xq, wq_ref[...],
                preferred_element_type=jnp.float32) + bq_ref[0]         # (tq, D)
    q = (q * (1.0 / math.sqrt(dh))).astype(k_sc.dtype)
    qh = jnp.swapaxes(q.reshape(tq, H, dh), 0, 1)                       # (H, tq, dh)

    kh = k_sc[...]                                                      # (H, S, dh)
    vh = v_sc[...]                                                      # (H, S, dh)

    # Batched-over-heads scores: single MXU dot_general, K consumed in its
    # native (H, S, dh) layout — no explicit transpose of K.
    s = jnp.einsum("hqd,hkd->hqk", qh, kh,
                   preferred_element_type=jnp.float32)                  # (H, tq, S)

    if causal:
        # One (tq, S) mask shared by all heads (hoisted out of any head loop).
        row = qi * tq + jax.lax.broadcasted_iota(jnp.int32, (tq, S), 0)
        col = jax.lax.broadcasted_iota(jnp.int32, (tq, S), 1)
        s = jnp.where((col > row)[None, :, :], -jnp.inf, s)

    # Numerically stable softmax; reciprocal runs on the EUP instead of a
    # full-rate vector divide.
    m = jnp.max(s, axis=-1, keepdims=True)
    e = jnp.exp(s - m)
    p = e * pl.reciprocal(jnp.sum(e, axis=-1, keepdims=True), approx=True)

    o = jnp.einsum("hqk,hkd->hqd", p.astype(vh.dtype), vh,
                   preferred_element_type=jnp.float32)                  # (H, tq, dh)
    attn = jnp.swapaxes(o, 0, 1).reshape(tq, D)                         # (tq, D)

    out = jnp.dot(attn.astype(wo_ref.dtype), wo_ref[...],
                  preferred_element_type=jnp.float32) + bo_ref[0]       # (tq, D)
    # Single lane-dense store of the whole (tq, D) tile.
    o_ref[0] = out.astype(o_ref.dtype)


def _pick_q_tile(seq_len):
    # Largest preferred tile that evenly divides S; otherwise fall back to the
    # full sequence (block == full dim, always a legal BlockSpec).
    for cand in (512, 256, 128):
        if seq_len % cand == 0:
            return cand
    return seq_len


def self_attention(x, w_in, b_in, w_out, b_out, *, n_heads, causal_mask=False):
    """Pallas TPU forward of the PyTorch SelfAttention module.

    x:     (B, S, D)
    w_in:  (3D, D)  torch nn.Linear layout (out_features, in_features)
    b_in:  (3D,)
    w_out: (D, D)
    b_out: (D,)
    """
    B, S, D = x.shape
    assert D % n_heads == 0
    d_head = D // n_heads

    # torch Linear computes y = x @ W.T + b; pre-transpose / split per q,k,v so
    # the kernel never column-slices a wide (D, 3D) weight in VMEM.
    w_in_t = jnp.transpose(w_in)                                  # (D, 3D)
    wq, wk, wv = (w_in_t[:, :D], w_in_t[:, D:2 * D], w_in_t[:, 2 * D:])
    bq = b_in[:D].reshape(1, D)
    bk = b_in[D:2 * D].reshape(1, D)
    bv = b_in[2 * D:].reshape(1, D)
    wo = jnp.transpose(w_out)                                     # (D, D)
    bo = b_out.reshape(1, D)

    tq = _pick_q_tile(S)
    n_q = S // tq

    kernel = functools.partial(
        _self_attention_kernel,
        n_heads=n_heads, d_head=d_head, q_tile=tq, causal=causal_mask)

    return pl.pallas_call(
        kernel,
        out_shape=jax.ShapeDtypeStruct((B, S, D), x.dtype),
        grid=(B, n_q),
        in_specs=[
            pl.BlockSpec((1, tq, D), lambda b, q: (b, q, 0)),   # x rows for Q
            pl.BlockSpec((1, S, D), lambda b, q: (b, 0, 0)),    # full x for K/V
            pl.BlockSpec((D, D), lambda b, q: (0, 0)),          # Wq^T
            pl.BlockSpec((1, D), lambda b, q: (0, 0)),          # bq
            pl.BlockSpec((D, D), lambda b, q: (0, 0)),          # Wk^T
            pl.BlockSpec((1, D), lambda b, q: (0, 0)),          # bk
            pl.BlockSpec((D, D), lambda b, q: (0, 0)),          # Wv^T
            pl.BlockSpec((1, D), lambda b, q: (0, 0)),          # bv
            pl.BlockSpec((D, D), lambda b, q: (0, 0)),          # Wo^T
            pl.BlockSpec((1, D), lambda b, q: (0, 0)),          # bo
        ],
        out_specs=pl.BlockSpec((1, tq, D), lambda b, q: (b, q, 0)),
        scratch_shapes=[
            pltpu.VMEM((n_heads, S, d_head), x.dtype),          # K heads cache
            pltpu.VMEM((n_heads, S, d_head), x.dtype),          # V heads cache
        ],
        compiler_params=pltpu.CompilerParams(
            # q-tile axis reuses the per-batch K/V scratch -> "arbitrary";
            # batch axis is independent -> "parallel" (megacore).
            dimension_semantics=("parallel", "arbitrary")),
    )(x, x, wq, bq, wk, bk, wv, bv, wo, bo)


def _reference(x, w_in, b_in, w_out, b_out, n_heads, causal_mask=False):
    """Pure-JAX reference mirroring the PyTorch forward."""
    B, S, D = x.shape
    dh = D // n_heads
    qkv = x @ w_in.T + b_in
    q, k, v = jnp.split(qkv, 3, axis=-1)

    def heads(t):
        return t.reshape(B, S, n_heads, dh).transpose(0, 2, 1, 3)

    q, k, v = heads(q), heads(k), heads(v)
    w = jnp.einsum('bhqd,bhkd->bhqk', q, k)
    if causal_mask:
        row = jax.lax.broadcasted_iota(jnp.int32, (S, S), 0)
        col = jax.lax.broadcasted_iota(jnp.int32, (S, S), 1)
        w = jnp.where(col > row, -jnp.inf, w)
    w = w / math.sqrt(dh)
    w = jax.nn.softmax(w, axis=-1)
    o = jnp.einsum('bhqk,bhkd->bhqd', w, v)
    o = o.transpose(0, 2, 1, 3).reshape(B, S, D)
    return o @ w_out.T + b_out


if __name__ == "__main__":
    B, S, D, H = 2, 8, 32, 4          # batch, seq, d_embed, n_heads

    key = jax.random.PRNGKey(0)
    kx, kw1, kb1, kw2, kb2 = jax.random.split(key, 5)

    x = jax.random.normal(kx, (B, S, D), dtype=jnp.float32)
    # torch nn.Linear weight layouts: in_proj (3D, D), out_proj (D, D).
    w_in = jax.random.normal(kw1, (3 * D, D), dtype=jnp.float32) * 0.05
    b_in = jax.random.normal(kb1, (3 * D,), dtype=jnp.float32) * 0.05
    w_out = jax.random.normal(kw2, (D, D), dtype=jnp.float32) * 0.05
    b_out = jax.random.normal(kb2, (D,), dtype=jnp.float32) * 0.05

    out = jax.block_until_ready(
        self_attention(x, w_in, b_in, w_out, b_out,
                       n_heads=H, causal_mask=False))
    ref = _reference(x, w_in, b_in, w_out, b_out, H, causal_mask=False)
    assert out.shape == (B, S, D)
    # approx reciprocal in the softmax denominator -> slightly relaxed tol.
    assert jnp.allclose(out, ref, atol=2e-3, rtol=2e-3)

    # causal path
    out_c = jax.block_until_ready(
        self_attention(x, w_in, b_in, w_out, b_out,
                       n_heads=H, causal_mask=True))
    ref_c = _reference(x, w_in, b_in, w_out, b_out, H, causal_mask=True)
    assert jnp.allclose(out_c, ref_c, atol=2e-3, rtol=2e-3)

    print("KERNEL_OK")
</pallas_src>

<mosaic_0001>
module attributes {stable_mosaic.version = 11 : i64} {
  func.func @_self_attention_kernel(%arg0: i32, %arg1: i32, %arg2: memref<1x8x32xf32, #tpu.memory_space<vmem>>, %arg3: memref<1x8x32xf32, #tpu.memory_space<vmem>>, %arg4: memref<32x32xf32, #tpu.memory_space<vmem>>, %arg5: memref<1x32xf32, #tpu.memory_space<vmem>>, %arg6: memref<32x32xf32, #tpu.memory_space<vmem>>, %arg7: memref<1x32xf32, #tpu.memory_space<vmem>>, %arg8: memref<32x32xf32, #tpu.memory_space<vmem>>, %arg9: memref<1x32xf32, #tpu.memory_space<vmem>>, %arg10: memref<32x32xf32, #tpu.memory_space<vmem>>, %arg11: memref<1x32xf32, #tpu.memory_space<vmem>>, %arg12: memref<1x8x32xf32, #tpu.memory_space<vmem>>, %arg13: memref<4x8x8xf32, #tpu.memory_space<vmem>>, %arg14: memref<4x8x8xf32, #tpu.memory_space<vmem>>) attributes {dimension_semantics = [#tpu.dimension_semantics<parallel>, #tpu.dimension_semantics<arbitrary>], iteration_bounds = array<i64: 2, 1>, scalar_prefetch = 0 : i64, scratch_operands = 2 : i64, tpu.core_type = #tpu.core_type<tc>, window_params = [{transform_indices = @transform_0, window_bounds = array<i64: 1, 8, 32>}, {transform_indices = @transform_1, window_bounds = array<i64: 1, 8, 32>}, {pipeline_mode = #tpu.pipeline_mode<synchronous>, transform_indices = @transform_2, window_bounds = array<i64: 32, 32>}, {pipeline_mode = #tpu.pipeline_mode<synchronous>, transform_indices = @transform_3, window_bounds = array<i64: 1, 32>}, {pipeline_mode = #tpu.pipeline_mode<synchronous>, transform_indices = @transform_4, window_bounds = array<i64: 32, 32>}, {pipeline_mode = #tpu.pipeline_mode<synchronous>, transform_indices = @transform_5, window_bounds = array<i64: 1, 32>}, {pipeline_mode = #tpu.pipeline_mode<synchronous>, transform_indices = @transform_6, window_bounds = array<i64: 32, 32>}, {pipeline_mode = #tpu.pipeline_mode<synchronous>, transform_indices = @transform_7, window_bounds = array<i64: 1, 32>}, {pipeline_mode = #tpu.pipeline_mode<synchronous>, transform_indices = @transform_8, window_bounds = array<i64: 32, 32>}, {pipeline_mode = #tpu.pipeline_mode<synchronous>, transform_indices = @transform_9, window_bounds = array<i64: 1, 32>}, {transform_indices = @transform_10, window_bounds = array<i64: 1, 8, 32>}]} {
    %c0_i32 = arith.constant 0 : i32
    %0 = arith.cmpi eq, %arg1, %c0_i32 : i32
    %1 = arith.extui %0 : i1 to i32
    %c0_i32_0 = arith.constant 0 : i32
    %2 = arith.cmpi ne, %1, %c0_i32_0 : i32
    scf.if %2 {
      %c0_26 = arith.constant 0 : index
      %c0_27 = arith.constant 0 : index
      %c0_28 = arith.constant 0 : index
      %42 = vector.load %arg3[%c0_26, %c0_27, %c0_28] : memref<1x8x32xf32, #tpu.memory_space<vmem>>, vector<1x8x32xf32>
      %43 = vector.shape_cast %42 : vector<1x8x32xf32> to vector<8x32xf32>
      %c0_29 = arith.constant 0 : index
      %c0_30 = arith.constant 0 : index
      %44 = vector.load %arg6[%c0_29, %c0_30] : memref<32x32xf32, #tpu.memory_space<vmem>>, vector<32x32xf32>
      %cst_31 = arith.constant dense<0.000000e+00> : vector<8x32xf32>
      %45 = tpu.matmul %43, %44, %cst_31 {dimension_numbers = #tpu.dot_dimension_numbers<[1], [0], [0], [1], [0, 0, 1, 1], [], []>} : vector<8x32xf32>, vector<32x32xf32>, vector<8x32xf32> -> vector<8x32xf32>
      %c0_32 = arith.constant 0 : index
      %c0_33 = arith.constant 0 : index
      %46 = vector.load %arg7[%c0_32, %c0_33] : memref<1x32xf32, #tpu.memory_space<vmem>>, vector<1x32xf32>
      %47 = vector.shape_cast %46 : vector<1x32xf32> to vector<32xf32>
      %48 = vector.shape_cast %47 : vector<32xf32> to vector<1x32xf32>
      %49 = vector.broadcast %48 : vector<1x32xf32> to vector<8x32xf32>
      %50 = arith.addf %45, %49 : vector<8x32xf32>
      %c0_34 = arith.constant 0 : index
      %c0_35 = arith.constant 0 : index
      %51 = vector.load %arg8[%c0_34, %c0_35] : memref<32x32xf32, #tpu.memory_space<vmem>>, vector<32x32xf32>
      %cst_36 = arith.constant dense<0.000000e+00> : vector<8x32xf32>
      %52 = tpu.matmul %43, %51, %cst_36 {dimension_numbers = #tpu.dot_dimension_numbers<[1], [0], [0], [1], [0, 0, 1, 1], [], []>} : vector<8x32xf32>, vector<32x32xf32>, vector<8x32xf32> -> vector<8x32xf32>
      %c0_37 = arith.constant 0 : index
      %c0_38 = arith.constant 0 : index
      %53 = vector.load %arg9[%c0_37, %c0_38] : memref<1x32xf32, #tpu.memory_space<vmem>>, vector<1x32xf32>
      %54 = vector.shape_cast %53 : vector<1x32xf32> to vector<32xf32>
      %55 = vector.shape_cast %54 : vector<32xf32> to vector<1x32xf32>
      %56 = vector.broadcast %55 : vector<1x32xf32> to vector<8x32xf32>
      %57 = arith.addf %52, %56 : vector<8x32xf32>
      %58 = vector.shape_cast %50 : vector<8x32xf32> to vector<8x4x8xf32>
      %59 = vector.shape_cast %57 : vector<8x32xf32> to vector<8x4x8xf32>
      %60 = tpu.transpose %58, [1, 0, 2] : vector<8x4x8xf32> -> vector<4x8x8xf32>
      %c0_39 = arith.constant 0 : index
      %c0_40 = arith.constant 0 : index
      %c0_41 = arith.constant 0 : index
      %61 = vector.load %arg13[%c0_39, %c0_40, %c0_41] : memref<4x8x8xf32, #tpu.memory_space<vmem>>, vector<4x8x8xf32>
      tpu.vector_store %arg13[%c0_39, %c0_40, %c0_41], %60 {strides = array<i32>} : memref<4x8x8xf32, #tpu.memory_space<vmem>>, vector<4x8x8xf32>,
      %62 = tpu.transpose %59, [1, 0, 2] : vector<8x4x8xf32> -> vector<4x8x8xf32>
      %c0_42 = arith.constant 0 : index
      %c0_43 = arith.constant 0 : index
      %c0_44 = arith.constant 0 : index
      %63 = vector.load %arg14[%c0_42, %c0_43, %c0_44] : memref<4x8x8xf32, #tpu.memory_space<vmem>>, vector<4x8x8xf32>
      tpu.vector_store %arg14[%c0_42, %c0_43, %c0_44], %62 {strides = array<i32>} : memref<4x8x8xf32, #tpu.memory_space<vmem>>, vector<4x8x8xf32>,
    } else {
    }
    %c0 = arith.constant 0 : index
    %c0_1 = arith.constant 0 : index
    %c0_2 = arith.constant 0 : index
    %3 = vector.load %arg2[%c0, %c0_1, %c0_2] : memref<1x8x32xf32, #tpu.memory_space<vmem>>, vector<1x8x32xf32>
    %4 = vector.shape_cast %3 : vector<1x8x32xf32> to vector<8x32xf32>
    %c0_3 = arith.constant 0 : index
    %c0_4 = arith.constant 0 : index
    %5 = vector.load %arg4[%c0_3, %c0_4] : memref<32x32xf32, #tpu.memory_space<vmem>>, vector<32x32xf32>
    %cst = arith.constant dense<0.000000e+00> : vector<8x32xf32>
    %6 = tpu.matmul %4, %5, %cst {dimension_numbers = #tpu.dot_dimension_numbers<[1], [0], [0], [1], [0, 0, 1, 1], [], []>} : vector<8x32xf32>, vector<32x32xf32>, vector<8x32xf32> -> vector<8x32xf32>
    %c0_5 = arith.constant 0 : index
    %c0_6 = arith.constant 0 : index
    %7 = vector.load %arg5[%c0_5, %c0_6] : memref<1x32xf32, #tpu.memory_space<vmem>>, vector<1x32xf32>
    %8 = vector.shape_cast %7 : vector<1x32xf32> to vector<32xf32>
    %9 = vector.shape_cast %8 : vector<32xf32> to vector<1x32xf32>
    %10 = vector.broadcast %9 : vector<1x32xf32> to vector<8x32xf32>
    %11 = arith.addf %6, %10 : vector<8x32xf32>
    %cst_7 = arith.constant 0.353553385 : f32
    %12 = vector.broadcast %cst_7 : f32 to vector<8x32xf32>
    %13 = arith.mulf %11, %12 : vector<8x32xf32>
    %14 = vector.shape_cast %13 : vector<8x32xf32> to vector<8x4x8xf32>
    %15 = tpu.transpose %14, [1, 0, 2] : vector<8x4x8xf32> -> vector<4x8x8xf32>
    %c0_8 = arith.constant 0 : index
    %c0_9 = arith.constant 0 : index
    %c0_10 = arith.constant 0 : index
    %16 = vector.load %arg13[%c0_8, %c0_9, %c0_10] : memref<4x8x8xf32, #tpu.memory_space<vmem>>, vector<4x8x8xf32>
    %c0_11 = arith.constant 0 : index
    %c0_12 = arith.constant 0 : index
    %c0_13 = arith.constant 0 : index
    %17 = vector.load %arg14[%c0_11, %c0_12, %c0_13] : memref<4x8x8xf32, #tpu.memory_space<vmem>>, vector<4x8x8xf32>
    "tpu.trace_start"() <{level = 10 : i32, message = "hqd,hkd->hqk"}> : () -> ()
    %cst_14 = arith.constant dense<0.000000e+00> : vector<4x8x8xf32>
    %18 = tpu.matmul %15, %16, %cst_14 {dimension_numbers = #tpu.dot_dimension_numbers<[2], [2], [1], [1], [0, 0, 0, 1, 1, 1], [0], [0]>} : vector<4x8x8xf32>, vector<4x8x8xf32>, vector<4x8x8xf32> -> vector<4x8x8xf32>
    "tpu.trace_stop"() : () -> ()
    %cst_15 = arith.constant dense<0xFF800000> : vector<4x8xf32>
    %19 = vector.multi_reduction <maximumf>, %18, %cst_15 [2] : vector<4x8x8xf32> to vector<4x8xf32>
    %20 = vector.shape_cast %19 : vector<4x8xf32> to vector<4x8x1xf32>
    %21 = vector.broadcast %20 : vector<4x8x1xf32> to vector<4x8x8xf32>
    %22 = arith.subf %18, %21 : vector<4x8x8xf32>
    %23 = math.exp %22 : vector<4x8x8xf32>
    %cst_16 = arith.constant dense<0.000000e+00> : vector<4x8xf32>
    %24 = vector.multi_reduction <add>, %23, %cst_16 [2] : vector<4x8x8xf32> to vector<4x8xf32>
    %25 = vector.shape_cast %24 : vector<4x8xf32> to vector<4x8x1xf32>
    %26 = tpu.reciprocal %25 {approx = true} : vector<4x8x1xf32> -> vector<4x8x1xf32>
    %27 = vector.broadcast %26 : vector<4x8x1xf32> to vector<4x8x8xf32>
    %28 = arith.mulf %23, %27 : vector<4x8x8xf32>
    "tpu.trace_start"() <{level = 10 : i32, message = "hqk,hkd->hqd"}> : () -> ()
    %cst_17 = arith.constant dense<0.000000e+00> : vector<4x8x8xf32>
    %29 = tpu.matmul %28, %17, %cst_17 {dimension_numbers = #tpu.dot_dimension_numbers<[2], [1], [1], [2], [0, 0, 0, 1, 1, 2], [0], [0]>} : vector<4x8x8xf32>, vector<4x8x8xf32>, vector<4x8x8xf32> -> vector<4x8x8xf32>
    "tpu.trace_stop"() : () -> ()
    %30 = tpu.transpose %29, [1, 0, 2] : vector<4x8x8xf32> -> vector<8x4x8xf32>
    %31 = vector.shape_cast %30 : vector<8x4x8xf32> to vector<8x32xf32>
    %c0_18 = arith.constant 0 : index
    %c0_19 = arith.constant 0 : index
    %32 = vector.load %arg10[%c0_18, %c0_19] : memref<32x32xf32, #tpu.memory_space<vmem>>, vector<32x32xf32>
    %cst_20 = arith.constant dense<0.000000e+00> : vector<8x32xf32>
    %33 = tpu.matmul %31, %32, %cst_20 {dimension_numbers = #tpu.dot_dimension_numbers<[1], [0], [0], [1], [0, 0, 1, 1], [], []>} : vector<8x32xf32>, vector<32x32xf32>, vector<8x32xf32> -> vector<8x32xf32>
    %c0_21 = arith.constant 0 : index
    %c0_22 = arith.constant 0 : index
    %34 = vector.load %arg11[%c0_21, %c0_22] : memref<1x32xf32, #tpu.memory_space<vmem>>, vector<1x32xf32>
    %35 = vector.shape_cast %34 : vector<1x32xf32> to vector<32xf32>
    %36 = vector.shape_cast %35 : vector<32xf32> to vector<1x32xf32>
    %37 = vector.broadcast %36 : vector<1x32xf32> to vector<8x32xf32>
    %38 = arith.addf %33, %37 : vector<8x32xf32>
    %c0_23 = arith.constant 0 : index
    %c0_24 = arith.constant 0 : index
    %c0_25 = arith.constant 0 : index
    %39 = vector.load %arg12[%c0_23, %c0_24, %c0_25] : memref<1x8x32xf32, #tpu.memory_space<vmem>>, vector<1x8x32xf32>
    %40 = vector.shape_cast %39 : vector<1x8x32xf32> to vector<8x32xf32>
    %41 = vector.shape_cast %38 : vector<8x32xf32> to vector<1x8x32xf32>
    tpu.vector_store %arg12[%c0_23, %c0_24, %c0_25], %41 {strides = array<i32>} : memref<1x8x32xf32, #tpu.memory_space<vmem>>, vector<1x8x32xf32>,
    return
  }
  func.func @transform_0(%arg0: i32, %arg1: i32) -> (i32, i32, i32) {
    %c0_i32 = arith.constant 0 : i32
    %c0_i32_0 = arith.constant 0 : i32
    return %arg0, %arg1, %c0_i32 : i32, i32, i32
  }
  func.func @transform_1(%arg0: i32, %arg1: i32) -> (i32, i32, i32) {
    %c0_i32 = arith.constant 0 : i32
    %c0_i32_0 = arith.constant 0 : i32
    %c0_i32_1 = arith.constant 0 : i32
    return %arg0, %c0_i32, %c0_i32_0 : i32, i32, i32
  }
  func.func @transform_2(%arg0: i32, %arg1: i32) -> (i32, i32) {
    %c0_i32 = arith.constant 0 : i32
    %c0_i32_0 = arith.constant 0 : i32
    %c0_i32_1 = arith.constant 0 : i32
    return %c0_i32, %c0_i32_0 : i32, i32
  }
  func.func @transform_3(%arg0: i32, %arg1: i32) -> (i32, i32) {
    %c0_i32 = arith.constant 0 : i32
    %c0_i32_0 = arith.constant 0 : i32
    %c0_i32_1 = arith.constant 0 : i32
    return %c0_i32, %c0_i32_0 : i32, i32
  }
  func.func @transform_4(%arg0: i32, %arg1: i32) -> (i32, i32) {
    %c0_i32 = arith.constant 0 : i32
    %c0_i32_0 = arith.constant 0 : i32
    %c0_i32_1 = arith.constant 0 : i32
    return %c0_i32, %c0_i32_0 : i32, i32
  }
  func.func @transform_5(%arg0: i32, %arg1: i32) -> (i32, i32) {
    %c0_i32 = arith.constant 0 : i32
    %c0_i32_0 = arith.constant 0 : i32
    %c0_i32_1 = arith.constant 0 : i32
    return %c0_i32, %c0_i32_0 : i32, i32
  }
  func.func @transform_6(%arg0: i32, %arg1: i32) -> (i32, i32) {
    %c0_i32 = arith.constant 0 : i32
    %c0_i32_0 = arith.constant 0 : i32
    %c0_i32_1 = arith.constant 0 : i32
    return %c0_i32, %c0_i32_0 : i32, i32
  }
  func.func @transform_7(%arg0: i32, %arg1: i32) -> (i32, i32) {
    %c0_i32 = arith.constant 0 : i32
    %c0_i32_0 = arith.constant 0 : i32
    %c0_i32_1 = arith.constant 0 : i32
    return %c0_i32, %c0_i32_0 : i32, i32
  }
  func.func @transform_8(%arg0: i32, %arg1: i32) -> (i32, i32) {
    %c0_i32 = arith.constant 0 : i32
    %c0_i32_0 = arith.constant 0 : i32
    %c0_i32_1 = arith.constant 0 : i32
    return %c0_i32, %c0_i32_0 : i32, i32
  }
  func.func @transform_9(%arg0: i32, %arg1: i32) -> (i32, i32) {
    %c0_i32 = arith.constant 0 : i32
    %c0_i32_0 = arith.constant 0 : i32
    %c0_i32_1 = arith.constant 0 : i32
    return %c0_i32, %c0_i32_0 : i32, i32
  }
  func.func @transform_10(%arg0: i32, %arg1: i32) -> (i32, i32, i32) {
    %c0_i32 = arith.constant 0 : i32
    %c0_i32_0 = arith.constant 0 : i32
    return %arg0, %arg1, %c0_i32 : i32, i32, i32
  }
}

</mosaic_0001>

<llo_original>
// kernel: tpu_custom_call.1
$region0: #{tpu_custom_call.1}
  #allocation0 [shape = 'u32[]', space=smem, size = 0x4, offset = 0x4, fixed_abs, tag = 'smem constant byte address 0x4 - core index']
  #allocation1 [shape = 'u32[144,128]{1,0:T(1,128)}', space=vmem, size = 0x12000, scoped, tag = 'internal scratch']
  #allocation2 [shape = 'f32[4,8,8]{2,1,0:T(8,128)}', space=vmem, size = 0x4000, scoped, tag = 'scratch operand']
  #allocation3 [shape = 'f32[4,8,8]{2,1,0:T(8,128)}', space=vmem, size = 0x4000, scoped, tag = 'scratch operand']
  %s0 = inlined_call_operand.hbm [shape: f32[2,8,32], index: 0, kind: input, shape index: {}]
  %s1 = inlined_call_operand.hbm [shape: f32[2,8,32], index: 1, kind: input, shape index: {}]
  %s2 = inlined_call_operand.hbm [shape: f32[32,32], index: 2, kind: input, shape index: {}]
  %s3 = inlined_call_operand.vmem [shape: f32[1,32], index: 3, kind: input, shape index: {}]
  %s4 = inlined_call_operand.hbm [shape: f32[32,32], index: 4, kind: input, shape index: {}]
  %s5 = inlined_call_operand.vmem [shape: f32[1,32], index: 5, kind: input, shape index: {}]
  %s6 = inlined_call_operand.hbm [shape: f32[32,32], index: 6, kind: input, shape index: {}]
  %s7 = inlined_call_operand.vmem [shape: f32[1,32], index: 7, kind: input, shape index: {}]
  %s8 = inlined_call_operand.hbm [shape: f32[32,32], index: 8, kind: input, shape index: {}]
  %s9 = inlined_call_operand.vmem [shape: f32[1,32], index: 9, kind: input, shape index: {}]
  %s10 = inlined_call_operand.hbm [shape: f32[2,8,32], index: 10, kind: output, shape index: {}]
  %s11 = sld [smem:[#allocation0]]
  $region101: #{tpu_custom_call.1} parent=0
    _
  %s13 = ssub.s32 1, %s11
  %s14 = scalar_select 0, %s13, %s11
  $region1: #{tpu_custom_call.1} parent=0
    #allocation4 [shape = 'u8[8192]{0}', space=vmem, size = 0x2000, scoped, tag = 'input window, operand 0']
    #allocation5 [shape = 's32[2]{0}', space=sflag, size = 0x8, scoped, tag = 'scoped memory for tpu_custom_call.1']
    #allocation6 [shape = 's32[2]{0}', space=sflag, size = 0x8, scoped, tag = 'scoped memory for tpu_custom_call.1']
    #allocation7 [shape = 'u8[8192]{0}', space=vmem, size = 0x2000, scoped, tag = 'input window, operand 1']
    #allocation8 [shape = 's32[2]{0}', space=sflag, size = 0x8, scoped, tag = 'scoped memory for tpu_custom_call.1']
    #allocation9 [shape = 'u8[16384]{0}', space=vmem, size = 0x4000, scoped, tag = 'input window, operand 2, single buffered']
    #allocation10 [shape = 'u8[16384]{0}', space=vmem, size = 0x4000, scoped, tag = 'input window, operand 4, single buffered']
    #allocation11 [shape = 's32[1]{0}', space=sflag, size = 0x4, scoped, tag = 'scoped memory for tpu_custom_call.1']
    #allocation12 [shape = 'u8[16384]{0}', space=vmem, size = 0x4000, scoped, tag = 'input window, operand 6, single buffered']
    #allocation13 [shape = 'u8[16384]{0}', space=vmem, size = 0x4000, scoped, tag = 'input window, operand 8, single buffered']
    #allocation14 [shape = 's32[1]{0}', space=sflag, size = 0x4, scoped, tag = 'scoped memory for tpu_custom_call.1']
    #allocation15 [shape = 'u8[8192]{0}', space=vmem, size = 0x2000, scoped, tag = 'output window, operand 0']
    %15 = vsyncpa [#allocation5], 0
    %s16 = scalar_lea.sflag [#allocation5], 1
    %17 = vsyncpa %s16, 0
    %18 = vsyncpa [#allocation8], 0
    %s19 = scalar_lea.sflag [#allocation8], 1
    %20 = vsyncpa %s19, 0
    %21 = vsyncpa [#allocation11], 0
    %22 = vsyncpa [#allocation14], 0
    %23 = vsyncpa [#allocation6], 0
    %s24 = scalar_lea.sflag [#allocation6], 1
    %25 = vsyncpa %s24, 0
    loop: start=0, step=1, limit=4
    $region2: #{tpu_custom_call.1} parent=1 // loop_pre_header
      _
    $region3: #{tpu_custom_call.1} parent=1 // loop_header
      %s27 = sphi 0, %s31
      %p28 = scmp.ge.s32.totalorder %s27, 4
      %s34 = sphi 0, %s46
      %s35 = sphi 0, %s42
      %s36 = sphi 0, %s34
      %s37 = sphi 0, %s35
      %s38 = sphi 0, %s36
      %s39 = sphi 0, %s37
      %s51 = sphi 0, %s53
      %s54 = sphi 0, %s51
      %s55 = sphi 0, %s54
      %s71 = sphi 0, %s55
      %s77 = sphi 0, %s79
      %s80 = sphi 0, %s77
      %s81 = sphi 0, %s80
      %s97 = sphi 0, %s81
      %s101 = sphi 0, %s101
      %s103 = sphi 0, %s101
      %s104 = sphi 0, %s103
      %s118 = sphi 0, %s104
      %s122 = sphi 0, %s122
      %s124 = sphi 0, %s122
      %s125 = sphi 0, %s124
      %s139 = sphi 0, %s125
      %s143 = sphi 0, %s143
      %s145 = sphi 0, %s143
      %s146 = sphi 0, %s145
      %s160 = sphi 0, %s146
      %s164 = sphi 0, %s164
      %s166 = sphi 0, %s164
      %s167 = sphi 0, %s166
      %s181 = sphi 0, %s167
      %s185 = sphi 0, %s185
      %s187 = sphi 0, %s185
      %s188 = sphi 0, %s187
      %s202 = sphi 0, %s188
      %s206 = sphi 0, %s206
      %s208 = sphi 0, %s206
      %s209 = sphi 0, %s208
      %s223 = sphi 0, %s209
      %s227 = sphi 0, %s227
      %s229 = sphi 0, %s227
      %s230 = sphi 0, %s229
      %s244 = sphi 0, %s230
      %s248 = sphi 0, %s248
      %s250 = sphi 0, %s248
      %s251 = sphi 0, %s250
      %s265 = sphi 0, %s251
      %s273 = sphi 0, %s275
      %s276 = sphi 0, %s273
      %s277 = sphi 0, %s276
      %s293 = sphi 0, %s277
    $region4: #{tpu_custom_call.1} parent=1 // loop_header_branch
      %30 = sbr.rel (%p28) target = $region8
    $region5: #{tpu_custom_call.1} parent=1 // loop_body
      %s32 = ssub.s32 %s27, 1
      %s33 = ssub.s32 %s27, 2
      %s40 = sadd.s32 1, %s35
      %p41 = scmp.ge.s32.totalorder %s40, 1
      %s42 = scalar_select %p41, 0, %s40
      %s43 = sadd.s32 1, %s34
      %s44 = scalar_select %p41, %s43, %s34
      %p45 = scmp.ge.s32.totalorder %s44, 2
      %s46 = scalar_select %p45, 0, %s44
      %s47 = ssub.s32 %s34, %s46
      %s48 = ssub.s32 %s35, %s42
      %s49 = sor.u32 %s47, %s48
      %p50 = scmp.eq.s32.totalorder %s49, 0
      %s52 = sadd.s32 %s51, 1
      %s53 = scalar_select %p50, %s51, %s52
      %p56 = pneg %p50
      %p57 = scmp.eq.s32.totalorder %s27, 1
      %p58 = por %p56, %p57
      %p59 = scmp.ne.s32.totalorder %s51, %s54
      %p60 = scmp.eq.s32.totalorder %s27, 0
      %p61 = por %p59, %p60
      %p62 = scmp.ne.s32.totalorder %s51, %s54
      %p63 = scmp.eq.s32.totalorder %s32, 1
      %p64 = por %p62, %p63
      %p65 = scmp.ne.s32.totalorder %s54, %s55
      %p66 = scmp.eq.s32.totalorder %s32, 0
      %p67 = por %p65, %p66
      %p68 = scmp.ne.s32.totalorder %s54, %s55
      %p69 = scmp.eq.s32.totalorder %s33, 1
      %p70 = por %p68, %p69
      %p72 = scmp.ne.s32.totalorder %s55, %s71
      %p73 = scmp.eq.s32.totalorder %s33, 0
      %p74 = por %p72, %p73
      %s75 = ssub.s32 %s34, %s46
      %p76 = scmp.eq.s32.totalorder %s75, 0
      %s78 = sadd.s32 %s77, 1
      %s79 = scalar_select %p76, %s77, %s78
      %p82 = pneg %p76
      %p83 = scmp.eq.s32.totalorder %s27, 1
      %p84 = por %p82, %p83
      %p85 = scmp.ne.s32.totalorder %s77, %s80
      %p86 = scmp.eq.s32.totalorder %s27, 0
      %p87 = por %p85, %p86
      %p88 = scmp.ne.s32.totalorder %s77, %s80
      %p89 = scmp.eq.s32.totalorder %s32, 1
      %p90 = por %p88, %p89
      %p91 = scmp.ne.s32.totalorder %s80, %s81
      %p92 = scmp.eq.s32.totalorder %s32, 0
      %p93 = por %p91, %p92
      %p94 = scmp.ne.s32.totalorder %s80, %s81
      %p95 = scmp.eq.s32.totalorder %s33, 1
      %p96 = por %p94, %p95
      %p98 = scmp.ne.s32.totalorder %s81, %s97
      %p99 = scmp.eq.s32.totalorder %s33, 0
      %p100 = por %p98, %p99
      %s102 = sadd.s32 %s101, 1
      %p105 = scmp.eq.s32.totalorder %s27, 1
      %p106 = scmp.ne.s32.totalorder %s101, %s103
      %p107 = scmp.eq.s32.totalorder %s27, 0
      %p108 = por %p106, %p107
      %p109 = scmp.ne.s32.totalorder %s101, %s103
      %p110 = scmp.eq.s32.totalorder %s32, 1
      %p111 = por %p109, %p110
      %p112 = scmp.ne.s32.totalorder %s103, %s104
      %p113 = scmp.eq.s32.totalorder %s32, 0
      %p114 = por %p112, %p113
      %p115 = scmp.ne.s32.totalorder %s103, %s104
      %p116 = scmp.eq.s32.totalorder %s33, 1
      %p117 = por %p115, %p116
      %p119 = scmp.ne.s32.totalorder %s104, %s118
      %p120 = scmp.eq.s32.totalorder %s33, 0
      %p121 = por %p119, %p120
      %s123 = sadd.s32 %s122, 1
      %p126 = scmp.eq.s32.totalorder %s27, 1
      %p127 = scmp.ne.s32.totalorder %s122, %s124
      %p128 = scmp.eq.s32.totalorder %s27, 0
      %p129 = por %p127, %p128
      %p130 = scmp.ne.s32.totalorder %s122, %s124
      %p131 = scmp.eq.s32.totalorder %s32, 1
      %p132 = por %p130, %p131
      %p133 = scmp.ne.s32.totalorder %s124, %s125
      %p134 = scmp.eq.s32.totalorder %s32, 0
      %p135 = por %p133, %p134
      %p136 = scmp.ne.s32.totalorder %s124, %s125
      %p137 = scmp.eq.s32.totalorder %s33, 1
      %p138 = por %p136, %p137
      %p140 = scmp.ne.s32.totalorder %s125, %s139
      %p141 = scmp.eq.s32.totalorder %s33, 0
      %p142 = por %p140, %p141
      %s144 = sadd.s32 %s143, 1
      %p147 = scmp.eq.s32.totalorder %s27, 1
      %p148 = scmp.ne.s32.totalorder %s143, %s145
      %p149 = scmp.eq.s32.totalorder %s27, 0
      %p150 = por %p148, %p149
      %p151 = scmp.ne.s32.totalorder %s143, %s145
      %p152 = scmp.eq.s32.totalorder %s32, 1
      %p153 = por %p151, %p152
      %p154 = scmp.ne.s32.totalorder %s145, %s146
      %p155 = scmp.eq.s32.totalorder %s32, 0
      %p156 = por %p154, %p155
      %p157 = scmp.ne.s32.totalorder %s145, %s146
      %p158 = scmp.eq.s32.totalorder %s33, 1
      %p159 = por %p157, %p158
      %p161 = scmp.ne.s32.totalorder %s146, %s160
      %p162 = scmp.eq.s32.totalorder %s33, 0
      %p163 = por %p161, %p162
      %s165 = sadd.s32 %s164, 1
      %p168 = scmp.eq.s32.totalorder %s27, 1
      %p169 = scmp.ne.s32.totalorder %s164, %s166
      %p170 = scmp.eq.s32.totalorder %s27, 0
      %p171 = por %p169, %p170
      %p172 = scmp.ne.s32.totalorder %s164, %s166
      %p173 = scmp.eq.s32.totalorder %s32, 1
      %p174 = por %p172, %p173
      %p175 = scmp.ne.s32.totalorder %s166, %s167
      %p176 = scmp.eq.s32.totalorder %s32, 0
      %p177 = por %p175, %p176
      %p178 = scmp.ne.s32.totalorder %s166, %s167
      %p179 = scmp.eq.s32.totalorder %s33, 1
      %p180 = por %p178, %p179
      %p182 = scmp.ne.s32.totalorder %s167, %s181
      %p183 = scmp.eq.s32.totalorder %s33, 0
      %p184 = por %p182, %p183
      %s186 = sadd.s32 %s185, 1
      %p189 = scmp.eq.s32.totalorder %s27, 1
      %p190 = scmp.ne.s32.totalorder %s185, %s187
      %p191 = scmp.eq.s32.totalorder %s27, 0
      %p192 = por %p190, %p191
      %p193 = scmp.ne.s32.totalorder %s185, %s187
      %p194 = scmp.eq.s32.totalorder %s32, 1
      %p195 = por %p193, %p194
      %p196 = scmp.ne.s32.totalorder %s187, %s188
      %p197 = scmp.eq.s32.totalorder %s32, 0
      %p198 = por %p196, %p197
      %p199 = scmp.ne.s32.totalorder %s187, %s188
      %p200 = scmp.eq.s32.totalorder %s33, 1
      %p201 = por %p199, %p200
      %p203 = scmp.ne.s32.totalorder %s188, %s202
      %p204 = scmp.eq.s32.totalorder %s33, 0
      %p205 = por %p203, %p204
      %s207 = sadd.s32 %s206, 1
      %p210 = scmp.eq.s32.totalorder %s27, 1
      %p211 = scmp.ne.s32.totalorder %s206, %s208
      %p212 = scmp.eq.s32.totalorder %s27, 0
      %p213 = por %p211, %p212
      %p214 = scmp.ne.s32.totalorder %s206, %s208
      %p215 = scmp.eq.s32.totalorder %s32, 1
      %p216 = por %p214, %p215
      %p217 = scmp.ne.s32.totalorder %s208, %s209
      %p218 = scmp.eq.s32.totalorder %s32, 0
      %p219 = por %p217, %p218
      %p220 = scmp.ne.s32.totalorder %s208, %s209
      %p221 = scmp.eq.s32.totalorder %s33, 1
      %p222 = por %p220, %p221
      %p224 = scmp.ne.s32.totalorder %s209, %s223
      %p225 = scmp.eq.s32.totalorder %s33, 0
      %p226 = por %p224, %p225
      %s228 = sadd.s32 %s227, 1
      %p231 = scmp.eq.s32.totalorder %s27, 1
      %p232 = scmp.ne.s32.totalorder %s227, %s229
      %p233 = scmp.eq.s32.totalorder %s27, 0
      %p234 = por %p232, %p233
      %p235 = scmp.ne.s32.totalorder %s227, %s229
      %p236 = scmp.eq.s32.totalorder %s32, 1
      %p237 = por %p235, %p236
      %p238 = scmp.ne.s32.totalorder %s229, %s230
      %p239 = scmp.eq.s32.totalorder %s32, 0
      %p240 = por %p238, %p239
      %p241 = scmp.ne.s32.totalorder %s229, %s230
      %p242 = scmp.eq.s32.totalorder %s33, 1
      %p243 = por %p241, %p242
      %p245 = scmp.ne.s32.totalorder %s230, %s244
      %p246 = scmp.eq.s32.totalorder %s33, 0
      %p247 = por %p245, %p246
      %s249 = sadd.s32 %s248, 1
      %p252 = scmp.eq.s32.totalorder %s27, 1
      %p253 = scmp.ne.s32.totalorder %s248, %s250
      %p254 = scmp.eq.s32.totalorder %s27, 0
      %p255 = por %p253, %p254
      %p256 = scmp.ne.s32.totalorder %s248, %s250
      %p257 = scmp.eq.s32.totalorder %s32, 1
      %p258 = por %p256, %p257
      %p259 = scmp.ne.s32.totalorder %s250, %s251
      %p260 = scmp.eq.s32.totalorder %s32, 0
      %p261 = por %p259, %p260
      %p262 = scmp.ne.s32.totalorder %s250, %s251
      %p263 = scmp.eq.s32.totalorder %s33, 1
      %p264 = por %p262, %p263
      %p266 = scmp.ne.s32.totalorder %s251, %s265
      %p267 = scmp.eq.s32.totalorder %s33, 0
      %p268 = por %p266, %p267
      %s269 = ssub.s32 %s34, %s46
      %s270 = ssub.s32 %s35, %s42
      %s271 = sor.u32 %s269, %s270
      %p272 = scmp.eq.s32.totalorder %s271, 0
      %s274 = sadd.s32 %s273, 1
      %s275 = scalar_select %p272, %s273, %s274
      %p278 = pneg %p272
      %p279 = scmp.eq.s32.totalorder %s27, 1
      %p280 = por %p278, %p279
      %p281 = scmp.ne.s32.totalorder %s273, %s276
      %p282 = scmp.eq.s32.totalorder %s27, 0
      %p283 = por %p281, %p282
      %p284 = scmp.ne.s32.totalorder %s273, %s276
      %p285 = scmp.eq.s32.totalorder %s32, 1
      %p286 = por %p284, %p285
      %p287 = scmp.ne.s32.totalorder %s276, %s277
      %p288 = scmp.eq.s32.totalorder %s32, 0
      %p289 = por %p287, %p288
      %p290 = scmp.ne.s32.totalorder %s276, %s277
      %p291 = scmp.eq.s32.totalorder %s33, 1
      %p292 = por %p290, %p291
      %p294 = scmp.ne.s32.totalorder %s277, %s293
      %p295 = scmp.eq.s32.totalorder %s33, 0
      %p296 = por %p294, %p295
      %p297 = scmp.le.s32.totalorder 1, %s27
      %p298 = scmp.lt.s32.totalorder %s27, 3
      %p299 = pnand %p297, %p298
      %p300 = pneg %p299
      // Predicated region
      $region9: #{tpu_custom_call.1} parent=5 // pred_check
        _
      $region10: #{tpu_custom_call.1} parent=5 // pred_check_branch
        %302 = sbr.rel (%p299) target = $region12
      $region11: #{tpu_custom_call.1} parent=5 // pred_region
        %s303 = ssub.s32 %s27, 1
        // Predicated region
        $region13: #{tpu_custom_call.1} parent=11 // pred_check
          %p304 = pneg %p114
        $region14: #{tpu_custom_call.1} parent=11 // pred_check_branch
          %306 = sbr.rel (%p304) target = $region16
        $region15: #{tpu_custom_call.1} parent=11 // pred_region
          %s308 = ssub.s32 512, 512
          %309 = vsyncadd [#allocation8], %s308
          %s310 = sshll.u32 [#allocation9], 4
          %s311 = int_to_ptr.vmem [resolvable:$true] %s310
          %316 = dma.hbm_to_vmem [thread:$0]  %s2, 512, %s311, [#allocation8], 128, 128, 8
        $region16: #{tpu_custom_call.1} parent=11 // pred_fallthru
          _
        // Predicated region
        $region17: #{tpu_custom_call.1} parent=11 // pred_check
          %p317 = pneg %p135
        $region18: #{tpu_custom_call.1} parent=11 // pred_check_branch
          %319 = sbr.rel (%p317) target = $region20
        $region19: #{tpu_custom_call.1} parent=11 // pred_region
          _
        $region20: #{tpu_custom_call.1} parent=11 // pred_fallthru
          _
        // Predicated region
        $region21: #{tpu_custom_call.1} parent=11 // pred_check
          %p320 = pneg %p156
        $region22: #{tpu_custom_call.1} parent=11 // pred_check_branch
          %322 = sbr.rel (%p320) target = $region24
        $region23: #{tpu_custom_call.1} parent=11 // pred_region
          %s324 = ssub.s32 512, 512
          %325 = vsyncadd [#allocation11], %s324
          %s326 = sshll.u32 [#allocation10], 4
          %s327 = int_to_ptr.vmem [resolvable:$true] %s326
          %332 = dma.hbm_to_vmem [thread:$0]  %s4, 512, %s327, [#allocation11], 128, 128, 8
        $region24: #{tpu_custom_call.1} parent=11 // pred_fallthru
          _
        // Predicated region
        $region25: #{tpu_custom_call.1} parent=11 // pred_check
          %p333 = pneg %p177
        $region26: #{tpu_custom_call.1} parent=11 // pred_check_branch
          %335 = sbr.rel (%p333) target = $region28
        $region27: #{tpu_custom_call.1} parent=11 // pred_region
          _
        $region28: #{tpu_custom_call.1} parent=11 // pred_fallthru
          _
        // Predicated region
        $region29: #{tpu_custom_call.1} parent=11 // pred_check
          %p336 = pneg %p198
        $region30: #{tpu_custom_call.1} parent=11 // pred_check_branch
          %338 = sbr.rel (%p336) target = $region32
        $region31: #{tpu_custom_call.1} parent=11 // pred_region
          %s340 = ssub.s32 512, 512
          %341 = vsyncadd [#allocation11], %s340
          %s342 = sshll.u32 [#allocation12], 4
          %s343 = int_to_ptr.vmem [resolvable:$true] %s342
          %348 = dma.hbm_to_vmem [thread:$0]  %s6, 512, %s343, [#allocation11], 128, 128, 8
        $region32: #{tpu_custom_call.1} parent=11 // pred_fallthru
          _
        // Predicated region
        $region33: #{tpu_custom_call.1} parent=11 // pred_check
          %p349 = pneg %p219
        $region34: #{tpu_custom_call.1} parent=11 // pred_check_branch
          %351 = sbr.rel (%p349) target = $region36
        $region35: #{tpu_custom_call.1} parent=11 // pred_region
          _
        $region36: #{tpu_custom_call.1} parent=11 // pred_fallthru
          _
        // Predicated region
        $region37: #{tpu_custom_call.1} parent=11 // pred_check
          %p352 = pneg %p240
        $region38: #{tpu_custom_call.1} parent=11 // pred_check_branch
          %354 = sbr.rel (%p352) target = $region40
        $region39: #{tpu_custom_call.1} parent=11 // pred_region
          %s356 = ssub.s32 512, 512
          %357 = vsyncadd [#allocation14], %s356
          %s358 = sshll.u32 [#allocation13], 4
          %s359 = int_to_ptr.vmem [resolvable:$true] %s358
          %364 = dma.hbm_to_vmem [thread:$0]  %s8, 512, %s359, [#allocation14], 128, 128, 8
        $region40: #{tpu_custom_call.1} parent=11 // pred_fallthru
          _
        // Predicated region
        $region41: #{tpu_custom_call.1} parent=11 // pred_check
          %p365 = pneg %p261
        $region42: #{tpu_custom_call.1} parent=11 // pred_check_branch
          %367 = sbr.rel (%p365) target = $region44
        $region43: #{tpu_custom_call.1} parent=11 // pred_region
          _
        $region44: #{tpu_custom_call.1} parent=11 // pred_fallthru
          _
      $region12: #{tpu_custom_call.1} parent=5 // pred_fallthru
        _
      %p368 = scmp.lt.s32.totalorder %s27, 2
      // Predicated region
      $region45: #{tpu_custom_call.1} parent=5 // pred_check
        %p369 = pneg %p368
      $region46: #{tpu_custom_call.1} parent=5 // pred_check_branch
        %371 = sbr.rel (%p369) target = $region48
      $region47: #{tpu_custom_call.1} parent=5 // pred_region
        // Predicated region
        $region49: #{tpu_custom_call.1} parent=47 // pred_check
          %p372 = pneg %p61
        $region50: #{tpu_custom_call.1} parent=47 // pred_check_branch
          %374 = sbr.rel (%p372) target = $region52
        $region51: #{tpu_custom_call.1} parent=47 // pred_region
          %s375 = sand.u32 %s51, 1
          %s376 = scalar_lea.sflag [#allocation5], %s375
          %s377 = sand.u32 %s51, 1
          %s378 = smul.addr %s377, 8
          %s379 = scalar_lea.vmem [#allocation4], %s378
          %s381 = ssub.s32 128, 128
          %382 = vsyncadd %s376, %s381
          %s383 = sadd.s32 %s35, %s34
          %s384 = smul.addr %s383, 128
          %s385 = scalar_lea.hbm %s0, %s384
          %s387 = sshll.u32 %s379, 4
          %s388 = int_to_ptr.vmem [resolvable:$true] %s387
          %390 = dma.hbm_to_vmem [thread:$0]  %s385, 128, %s388, %s376
        $region52: #{tpu_custom_call.1} parent=47 // pred_fallthru
          _
        // Predicated region
        $region53: #{tpu_custom_call.1} parent=47 // pred_check
          %p391 = pneg %p87
        $region54: #{tpu_custom_call.1} parent=47 // pred_check_branch
          %393 = sbr.rel (%p391) target = $region56
        $region55: #{tpu_custom_call.1} parent=47 // pred_region
          %s394 = sand.u32 %s27, 1
          %s395 = scalar_lea.sflag [#allocation8], %s394
          %s396 = sand.u32 %s77, 1
          %s397 = smul.addr %s396, 8
          %s398 = scalar_lea.vmem [#allocation7], %s397
          %s400 = ssub.s32 128, 128
          %401 = vsyncadd %s395, %s400
          %s402 = smul.addr %s34, 128
          %s403 = scalar_lea.hbm %s1, %s402
          %s405 = sshll.u32 %s398, 4
          %s406 = int_to_ptr.vmem [resolvable:$true] %s405
          %408 = dma.hbm_to_vmem [thread:$0]  %s403, 128, %s406, %s395
        $region56: #{tpu_custom_call.1} parent=47 // pred_fallthru
          _
      $region48: #{tpu_custom_call.1} parent=5 // pred_fallthru
        _
      %p409 = scmp.le.s32.totalorder 1, %s27
      %p410 = scmp.lt.s32.totalorder %s27, 3
      %p411 = pnand %p409, %p410
      %p412 = pneg %p411
      // Predicated region
      $region57: #{tpu_custom_call.1} parent=5 // pred_check
        _
      $region58: #{tpu_custom_call.1} parent=5 // pred_check_branch
        %414 = sbr.rel (%p411) target = $region60
      $region59: #{tpu_custom_call.1} parent=5 // pred_region
        %s415 = ssub.s32 %s27, 1
        %s416 = sand.u32 %s54, 1
        %s417 = scalar_lea.sflag [#allocation5], %s416
        %s418 = sand.u32 %s54, 1
        %s419 = smul.addr %s418, 8
        %s420 = scalar_lea.vmem [#allocation4], %s419
        // Predicated region
        $region61: #{tpu_custom_call.1} parent=59 // pred_check
          %p421 = pneg %p67
        $region62: #{tpu_custom_call.1} parent=59 // pred_check_branch
          %423 = sbr.rel (%p421) target = $region64
        $region63: #{tpu_custom_call.1} parent=59 // pred_region
          %424 = dma.done %s417, 128
        $region64: #{tpu_custom_call.1} parent=59 // pred_fallthru
          _
        %s425 = sand.u32 %s32, 1
        %s426 = scalar_lea.sflag [#allocation8], %s425
        %s427 = sand.u32 %s80, 1
        %s428 = smul.addr %s427, 8
        %s429 = scalar_lea.vmem [#allocation7], %s428
        // Predicated region
        $region65: #{tpu_custom_call.1} parent=59 // pred_check
          %p430 = pneg %p93
        $region66: #{tpu_custom_call.1} parent=59 // pred_check_branch
          %432 = sbr.rel (%p430) target = $region68
        $region67: #{tpu_custom_call.1} parent=59 // pred_region
          %433 = dma.done %s426, 128
        $region68: #{tpu_custom_call.1} parent=59 // pred_fallthru
          _
        // Predicated region
        $region69: #{tpu_custom_call.1} parent=59 // pred_check
          %p434 = pneg %p114
        $region70: #{tpu_custom_call.1} parent=59 // pred_check_branch
          %436 = sbr.rel (%p434) target = $region72
        $region71: #{tpu_custom_call.1} parent=59 // pred_region
          %437 = dma.done [#allocation8], 512
        $region72: #{tpu_custom_call.1} parent=59 // pred_fallthru
          _
        // Predicated region
        $region73: #{tpu_custom_call.1} parent=59 // pred_check
          %p438 = pneg %p156
        $region74: #{tpu_custom_call.1} parent=59 // pred_check_branch
          %440 = sbr.rel (%p438) target = $region76
        $region75: #{tpu_custom_call.1} parent=59 // pred_region
          %441 = dma.done [#allocation11], 512
        $region76: #{tpu_custom_call.1} parent=59 // pred_fallthru
          _
        // Predicated region
        $region77: #{tpu_custom_call.1} parent=59 // pred_check
          %p442 = pneg %p198
        $region78: #{tpu_custom_call.1} parent=59 // pred_check_branch
          %444 = sbr.rel (%p442) target = $region80
        $region79: #{tpu_custom_call.1} parent=59 // pred_region
          %445 = dma.done [#allocation11], 512
        $region80: #{tpu_custom_call.1} parent=59 // pred_fallthru
          _
        // Predicated region
        $region81: #{tpu_custom_call.1} parent=59 // pred_check
          %p446 = pneg %p240
        $region82: #{tpu_custom_call.1} parent=59 // pred_check_branch
          %448 = sbr.rel (%p446) target = $region84
        $region83: #{tpu_custom_call.1} parent=59 // pred_region
          %449 = dma.done [#allocation14], 512
        $region84: #{tpu_custom_call.1} parent=59 // pred_fallthru
          _
        %s450 = sand.u32 %s54, 1
        %s451 = scalar_lea.sflag [#allocation5], %s450
        %s452 = sand.u32 %s54, 1
        %s453 = smul.addr %s452, 8
        %s454 = scalar_lea.vmem [#allocation4], %s453
        %p455 = pneg %p67
        %p456 = pneg %p64
        %s457 = sand.u32 %s32, 1
        %s458 = scalar_lea.sflag [#allocation8], %s457
        %s459 = sand.u32 %s80, 1
        %s460 = smul.addr %s459, 8
        %s461 = scalar_lea.vmem [#allocation7], %s460
        %p462 = pneg %p93
        %p463 = pneg %p90
        %p464 = pneg %p114
        %p465 = pneg %p111
        %p466 = pneg %p135
        %p467 = pneg %p132
        %p468 = pneg %p156
        %p469 = pneg %p153
        %p470 = pneg %p177
        %p471 = pneg %p174
        %p472 = pneg %p198
        %p473 = pneg %p195
        %p474 = pneg %p219
        %p475 = pneg %p216
        %p476 = pneg %p240
        %p477 = pneg %p237
        %p478 = pneg %p261
        %p479 = pneg %p258
        %p480 = pneg %p289
        %p481 = pneg %p286
        %s482 = sand.u32 %s276, 1
        %s483 = scalar_lea.sflag [#allocation6], %s482
        %s484 = sand.u32 %s276, 1
        %s485 = smul.addr %s484, 8
        %s486 = scalar_lea.vmem [#allocation15], %s485
        %p487 = scmp.eq.s32.totalorder %s37, 0
        // Predicated region
        $region85: #{tpu_custom_call.1} parent=59 // pred_check
          %p488 = pneg %p487
        $region86: #{tpu_custom_call.1} parent=59 // pred_check_branch
          %490 = sbr.rel (%p488) target = $region88
        $region87: #{tpu_custom_call.1} parent=59 // pred_region
          %v491 = vld [vmem:[%s429] sm:$0xff]
          %v492 = vld [vmem:[#allocation10] sm:$0xff]
          %v493 = vld [vmem:[#allocation10 + $0x8] sm:$0xff]
          %v494 = vld [vmem:[#allocation10 + $0x10] sm:$0xff]
          %v495 = vld [vmem:[#allocation10 + $0x18] sm:$0xff]
          %v496 = vld [vmem:[%s5] sm:$0x1]
          %v498 = vlaneseq
          %v499 = vshrl.u32 %v498, 7
          %v500 = vsub.s32 0, %v499
          %v501 = vrot.slane %v496, %v500
          %vm503 = vcmask 261120
          %v505 = vsel %vm503, %v491, 0
          %507 = vmatprep.subr.mxu0 0.0
          %508 = vmatpush1.msra.mxu0 %v492
          %509 = vmatprep.subr.mxu0 0.0
          %510 = vmatpush1.msra.mxu0 %v493
          %511 = vmatprep.subr.mxu0 0.0
          %512 = vmatpush1.msra.mxu0 %v494
          %513 = vmatprep.subr.mxu0 0.0
          %514 = vmatpush1.msra.mxu0 %v495
          %515 = vmatprep.subr.mxu0 0.0
          %516 = vmatpush1.msra.mxu0 0.0
          %517 = vmatprep.subr.mxu0 0.0
          %518 = vmatpush1.msra.mxu0 0.0
          %519 = vmatprep.subr.mxu0 0.0
          %520 = vmatpush1.msra.mxu0 0.0
          %521 = vmatprep.subr.mxu0 0.0
          %522 = vmatpush1.msra.mxu0 0.0
          %523 = vmatprep.subr.mxu0 0.0
          %524 = vmatpush1.msra.mxu0 0.0
          %525 = vmatprep.subr.mxu0 0.0
          %526 = vmatpush1.msra.mxu0 0.0
          %527 = vmatprep.subr.mxu0 0.0
          %528 = vmatpush1.msra.mxu0 0.0
          %529 = vmatprep.subr.mxu0 0.0
          %530 = vmatpush1.msra.mxu0 0.0
          %531 = vmatprep.subr.mxu0 0.0
          %532 = vmatpush1.msra.mxu0 0.0
          %533 = vmatprep.subr.mxu0 0.0
          %534 = vmatpush1.msra.mxu0 0.0
          %535 = vmatprep.subr.mxu0 0.0
          %536 = vmatpush1.msra.mxu0 0.0
          %537 = vmatprep.subr.mxu0 0.0
          %538 = vmatpush1.msra.mxu0 0.0
          %539 = vmatprep.subr.mxu0 0.0
          %540 = vmatpush1.msra.mxu0 0.0
          %541 = vmatprep.subr.mxu0 0.0
          %542 = vmatpush1.msra.mxu0 0.0
          %543 = vmatprep.subr.mxu0 0.0
          %544 = vmatpush1.msra.mxu0 0.0
          %545 = vmatprep.subr.mxu0 0.0
          %546 = vmatpush1.msra.mxu0 0.0
          %547 = vmatprep.subr.mxu0 0.0
          %548 = vmatpush1.msra.mxu0 0.0
          %549 = vmatprep.subr.mxu0 0.0
          %550 = vmatpush1.msra.mxu0 0.0
          %551 = vmatprep.subr.mxu0 0.0
          %552 = vmatpush1.msra.mxu0 0.0
          %553 = vmatprep.subr.mxu0 0.0
          %554 = vmatpush1.msra.mxu0 0.0
          %555 = vmatprep.subr.mxu0 0.0
          %556 = vmatpush1.msra.mxu0 0.0
          %557 = vmatprep.subr.mxu0 0.0
          %558 = vmatpush1.msra.mxu0 0.0
          %559 = vmatprep.subr.mxu0 0.0
          %560 = vmatpush1.msra.mxu0 0.0
          %561 = vmatprep.subr.mxu0 0.0
          %562 = vmatpush1.msra.mxu0 0.0
          %563 = vmatprep.subr.mxu0 0.0
          %564 = vmatpush1.msra.mxu0 0.0
          %565 = vmatprep.subr.mxu0 0.0
          %566 = vmatpush1.msra.mxu0 0.0
          %567 = vmatprep.subr.mxu0 0.0
          %568 = vmatpush1.msra.mxu0 0.0
          %569 = vmatprep.subr.mxu0 0.0
          %570 = vmatpush1.msra.mxu0 0.0
          %571 = vmatprep.mubr.f32.mxu0 0.0
          %572 = vmatmul.mubr.f32.gmra.mrb[0].mxu0 %v505
          %v573 = vpop.f32.mrb[0].mxu0
          %v574 = vadd.f32 %v501, %v573
          %v575 = vpop.f32.mrb[0].mxu0
          %576 = vdwg.mxu0
          %v577 = vld [vmem:[#allocation12] sm:$0xff]
          %v578 = vld [vmem:[#allocation12 + $0x8] sm:$0xff]
          %v579 = vld [vmem:[#allocation12 + $0x10] sm:$0xff]
          %v580 = vld [vmem:[#allocation12 + $0x18] sm:$0xff]
          %v581 = vld [vmem:[%s7] sm:$0x1]
          %v583 = vlaneseq
          %v584 = vshrl.u32 %v583, 7
          %v585 = vsub.s32 0, %v584
          %v586 = vrot.slane %v581, %v585
          %588 = vmatprep.subr.mxu0 0.0
          %589 = vmatpush1.msra.mxu0 %v577
          %590 = vmatprep.subr.mxu0 0.0
          %591 = vmatpush1.msra.mxu0 %v578
          %592 = vmatprep.subr.mxu0 0.0
          %593 = vmatpush1.msra.mxu0 %v579
          %594 = vmatprep.subr.mxu0 0.0
          %595 = vmatpush1.msra.mxu0 %v580
          %596 = vmatprep.subr.mxu0 0.0
          %597 = vmatpush1.msra.mxu0 0.0
          %598 = vmatprep.subr.mxu0 0.0
          %599 = vmatpush1.msra.mxu0 0.0
          %600 = vmatprep.subr.mxu0 0.0
          %601 = vmatpush1.msra.mxu0 0.0
          %602 = vmatprep.subr.mxu0 0.0
          %603 = vmatpush1.msra.mxu0 0.0
          %604 = vmatprep.subr.mxu0 0.0
          %605 = vmatpush1.msra.mxu0 0.0
          %606 = vmatprep.subr.mxu0 0.0
          %607 = vmatpush1.msra.mxu0 0.0
          %608 = vmatprep.subr.mxu0 0.0
          %609 = vmatpush1.msra.mxu0 0.0
          %610 = vmatprep.subr.mxu0 0.0
          %611 = vmatpush1.msra.mxu0 0.0
          %612 = vmatprep.subr.mxu0 0.0
          %613 = vmatpush1.msra.mxu0 0.0
          %614 = vmatprep.subr.mxu0 0.0
          %615 = vmatpush1.msra.mxu0 0.0
          %616 = vmatprep.subr.mxu0 0.0
          %617 = vmatpush1.msra.mxu0 0.0
          %618 = vmatprep.subr.mxu0 0.0
          %619 = vmatpush1.msra.mxu0 0.0
          %620 = vmatprep.subr.mxu0 0.0
          %621 = vmatpush1.msra.mxu0 0.0
          %622 = vmatprep.subr.mxu0 0.0
          %623 = vmatpush1.msra.mxu0 0.0
          %624 = vmatprep.subr.mxu0 0.0
          %625 = vmatpush1.msra.mxu0 0.0
          %626 = vmatprep.subr.mxu0 0.0
          %627 = vmatpush1.msra.mxu0 0.0
          %628 = vmatprep.subr.mxu0 0.0
          %629 = vmatpush1.msra.mxu0 0.0
          %630 = vmatprep.subr.mxu0 0.0
          %631 = vmatpush1.msra.mxu0 0.0
          %632 = vmatprep.subr.mxu0 0.0
          %633 = vmatpush1.msra.mxu0 0.0
          %634 = vmatprep.subr.mxu0 0.0
          %635 = vmatpush1.msra.mxu0 0.0
          %636 = vmatprep.subr.mxu0 0.0
          %637 = vmatpush1.msra.mxu0 0.0
          %638 = vmatprep.subr.mxu0 0.0
          %639 = vmatpush1.msra.mxu0 0.0
          %640 = vmatprep.subr.mxu0 0.0
          %641 = vmatpush1.msra.mxu0 0.0
          %642 = vmatprep.subr.mxu0 0.0
          %643 = vmatpush1.msra.mxu0 0.0
          %644 = vmatprep.subr.mxu0 0.0
          %645 = vmatpush1.msra.mxu0 0.0
          %646 = vmatprep.subr.mxu0 0.0
          %647 = vmatpush1.msra.mxu0 0.0
          %648 = vmatprep.subr.mxu0 0.0
          %649 = vmatpush1.msra.mxu0 0.0
          %650 = vmatprep.subr.mxu0 0.0
          %651 = vmatpush1.msra.mxu0 0.0
          %652 = vmatprep.mubr.f32.mxu0 0.0
          %653 = vmatmul.mubr.f32.gmra.mrb[0].mxu0 %v505
          %v654 = vpop.f32.mrb[0].mxu0
          %v655 = vadd.f32 %v586, %v654
          %v656 = vpop.f32.mrb[0].mxu0
          %657 = vdwg.mxu0
          %659 = vrot.lane.b32.xlu0 %v574, 120
          %v660 = vpop.permute.xlu0 %659
          %662 = vrot.lane.b32.xlu0 %v574, 112
          %v663 = vpop.permute.xlu0 %662
          %665 = vrot.lane.b32.xlu0 %v574, 104
          %v666 = vpop.permute.xlu0 %665
          %v668 = vcombine.low %v574, %v663
          %v669 = vcombine.high %v574, %v663
          %v671 = vunpack.c.l.s4 1983009808
          %v672 = vunpack.c.0.s8 %v671
          %v673 = vlaneseq
          %v674 = vshrl.u32 %v673, 7
          %v675 = vsub.s32 %v672, %v674
          %v676 = vrot.slane %v668, %v675
          %v678 = vunpack.c.l.s4 1983009808
          %v679 = vunpack.c.0.s8 %v678
          %v680 = vlaneseq
          %v681 = vshrl.u32 %v680, 7
          %v682 = vsub.s32 %v679, %v681
          %v683 = vrot.slane %v669, %v682
          %v684 = vcombine.low %v660, %v666
          %v685 = vcombine.high %v660, %v666
          %v687 = vunpack.c.l.s4 1983009808
          %v688 = vunpack.c.0.s8 %v687
          %v689 = vlaneseq
          %v690 = vshrl.u32 %v689, 7
          %v691 = vsub.s32 %v688, %v690
          %v692 = vrot.slane %v684, %v691
          %v694 = vunpack.c.l.s4 1983009808
          %v695 = vunpack.c.0.s8 %v694
          %v696 = vlaneseq
          %v697 = vshrl.u32 %v696, 7
          %v698 = vsub.s32 %v695, %v697
          %v699 = vrot.slane %v685, %v698
          %v700 = vcombine.low %v676, %v692
          %v701 = vcombine.high %v676, %v692
          %v703 = vunpack.c.l.s4 1934713408
          %v704 = vunpack.c.0.s8 %v703
          %v705 = vlaneseq
          %v706 = vshrl.u32 %v705, 7
          %v707 = vsub.s32 %v704, %v706
          %v708 = vrot.slane %v700, %v707
          %v710 = vunpack.c.l.s4 1934713408
          %v711 = vunpack.c.0.s8 %v710
          %v712 = vlaneseq
          %v713 = vshrl.u32 %v712, 7
          %v714 = vsub.s32 %v711, %v713
          %v715 = vrot.slane %v701, %v714
          %v716 = vcombine.low %v683, %v699
          %v717 = vcombine.high %v683, %v699
          %v719 = vunpack.c.l.s4 1934713408
          %v720 = vunpack.c.0.s8 %v719
          %v721 = vlaneseq
          %v722 = vshrl.u32 %v721, 7
          %v723 = vsub.s32 %v720, %v722
          %v724 = vrot.slane %v716, %v723
          %v726 = vunpack.c.l.s4 1934713408
          %v727 = vunpack.c.0.s8 %v726
          %v728 = vlaneseq
          %v729 = vshrl.u32 %v728, 7
          %v730 = vsub.s32 %v727, %v729
          %v731 = vrot.slane %v717, %v730
          %v732 = vcombine.high %v708, 0.0
          %v733 = vcombine.high %v715, 0.0
          %v734 = vcombine.high %v724, 0.0
          %v735 = vcombine.high %v731, 0.0
          %737 = vrot.lane.b32.xlu0 %v655, 120
          %v738 = vpop.permute.xlu0 %737
          %740 = vrot.lane.b32.xlu0 %v655, 112
          %v741 = vpop.permute.xlu0 %740
          %743 = vrot.lane.b32.xlu0 %v655, 104
          %v744 = vpop.permute.xlu0 %743
          %v746 = vcombine.low %v655, %v741
          %v747 = vcombine.high %v655, %v741
          %v749 = vunpack.c.l.s4 1983009808
          %v750 = vunpack.c.0.s8 %v749
          %v751 = vlaneseq
          %v752 = vshrl.u32 %v751, 7
          %v753 = vsub.s32 %v750, %v752
          %v754 = vrot.slane %v746, %v753
          %v756 = vunpack.c.l.s4 1983009808
          %v757 = vunpack.c.0.s8 %v756
          %v758 = vlaneseq
          %v759 = vshrl.u32 %v758, 7
          %v760 = vsub.s32 %v757, %v759
          %v761 = vrot.slane %v747, %v760
          %v762 = vcombine.low %v738, %v744
          %v763 = vcombine.high %v738, %v744
          %v765 = vunpack.c.l.s4 1983009808
          %v766 = vunpack.c.0.s8 %v765
          %v767 = vlaneseq
          %v768 = vshrl.u32 %v767, 7
          %v769 = vsub.s32 %v766, %v768
          %v770 = vrot.slane %v762, %v769
          %v772 = vunpack.c.l.s4 1983009808
          %v773 = vunpack.c.0.s8 %v772
          %v774 = vlaneseq
          %v775 = vshrl.u32 %v774, 7
          %v776 = vsub.s32 %v773, %v775
          %v777 = vrot.slane %v763, %v776
          %v778 = vcombine.low %v754, %v770
          %v779 = vcombine.high %v754, %v770
          %v781 = vunpack.c.l.s4 1934713408
          %v782 = vunpack.c.0.s8 %v781
          %v783 = vlaneseq
          %v784 = vshrl.u32 %v783, 7
          %v785 = vsub.s32 %v782, %v784
          %v786 = vrot.slane %v778, %v785
          %v788 = vunpack.c.l.s4 1934713408
          %v789 = vunpack.c.0.s8 %v788
          %v790 = vlaneseq
          %v791 = vshrl.u32 %v790, 7
          %v792 = vsub.s32 %v789, %v791
          %v793 = vrot.slane %v779, %v792
          %v794 = vcombine.low %v761, %v777
          %v795 = vcombine.high %v761, %v777
          %v797 = vunpack.c.l.s4 1934713408
          %v798 = vunpack.c.0.s8 %v797
          %v799 = vlaneseq
          %v800 = vshrl.u32 %v799, 7
          %v801 = vsub.s32 %v798, %v800
          %v802 = vrot.slane %v794, %v801
          %v804 = vunpack.c.l.s4 1934713408
          %v805 = vunpack.c.0.s8 %v804
          %v806 = vlaneseq
          %v807 = vshrl.u32 %v806, 7
          %v808 = vsub.s32 %v805, %v807
          %v809 = vrot.slane %v795, %v808
          %v810 = vcombine.high %v786, 0.0
          %v811 = vcombine.high %v793, 0.0
          %v812 = vcombine.high %v802, 0.0
          %v813 = vcombine.high %v809, 0.0
          %v814 = vcombine.low %v708, %v715
          %v816 = vunpack.c.l.s4 1983009808
          %v817 = vunpack.c.0.s8 %v816
          %v818 = vlaneseq
          %v819 = vshrl.u32 %v818, 7
          %v820 = vsub.s32 %v817, %v819
          %v821 = vrot.slane %v814, %v820
          %v822 = vcombine.low %v732, %v733
          %v824 = vunpack.c.l.s4 1983009808
          %v825 = vunpack.c.0.s8 %v824
          %v826 = vlaneseq
          %v827 = vshrl.u32 %v826, 7
          %v828 = vsub.s32 %v825, %v827
          %v829 = vrot.slane %v822, %v828
          %v830 = vcombine.low %v724, %v731
          %v832 = vunpack.c.l.s4 1983009808
          %v833 = vunpack.c.0.s8 %v832
          %v834 = vlaneseq
          %v835 = vshrl.u32 %v834, 7
          %v836 = vsub.s32 %v833, %v835
          %v837 = vrot.slane %v830, %v836
          %v838 = vcombine.low %v734, %v735
          %v840 = vunpack.c.l.s4 1983009808
          %v841 = vunpack.c.0.s8 %v840
          %v842 = vlaneseq
          %v843 = vshrl.u32 %v842, 7
          %v844 = vsub.s32 %v841, %v843
          %v845 = vrot.slane %v838, %v844
          %v846 = vcombine.low %v821, %v829
          %v847 = vcombine.high %v821, %v829
          %v849 = vunpack.c.l.s4 1934713408
          %v850 = vunpack.c.0.s8 %v849
          %v851 = vlaneseq
          %v852 = vshrl.u32 %v851, 7
          %v853 = vsub.s32 %v850, %v852
          %v854 = vrot.slane %v846, %v853
          %v856 = vunpack.c.l.s4 1934713408
          %v857 = vunpack.c.0.s8 %v856
          %v858 = vlaneseq
          %v859 = vshrl.u32 %v858, 7
          %v860 = vsub.s32 %v857, %v859
          %v861 = vrot.slane %v847, %v860
          %v862 = vcombine.low %v837, %v845
          %v863 = vcombine.high %v837, %v845
          %v865 = vunpack.c.l.s4 1934713408
          %v866 = vunpack.c.0.s8 %v865
          %v867 = vlaneseq
          %v868 = vshrl.u32 %v867, 7
          %v869 = vsub.s32 %v866, %v868
          %v870 = vrot.slane %v862, %v869
          %v872 = vunpack.c.l.s4 1934713408
          %v873 = vunpack.c.0.s8 %v872
          %v874 = vlaneseq
          %v875 = vshrl.u32 %v874, 7
          %v876 = vsub.s32 %v873, %v875
          %v877 = vrot.slane %v863, %v876
          %v878 = vcombine.low %v854, %v870
          %v879 = vcombine.high %v854, %v870
          %v880 = vcombine.low %v861, %v877
          %v881 = vcombine.high %v861, %v877
          %vm882 = vcmask 64512
          %883 = vst.msk [vmem:[#allocation2] sm:$0xff] %vm882, %v878
          %884 = vst.msk [vmem:[#allocation2 + $0x8] sm:$0xff] %vm882, %v879
          %885 = vst.msk [vmem:[#allocation2 + $0x10] sm:$0xff] %vm882, %v880
          %886 = vst.msk [vmem:[#allocation2 + $0x18] sm:$0xff] %vm882, %v881
          %v887 = vcombine.low %v786, %v793
          %v889 = vunpack.c.l.s4 1983009808
          %v890 = vunpack.c.0.s8 %v889
          %v891 = vlaneseq
          %v892 = vshrl.u32 %v891, 7
          %v893 = vsub.s32 %v890, %v892
          %v894 = vrot.slane %v887, %v893
          %v895 = vcombine.low %v810, %v811
          %v897 = vunpack.c.l.s4 1983009808
          %v898 = vunpack.c.0.s8 %v897
          %v899 = vlaneseq
          %v900 = vshrl.u32 %v899, 7
          %v901 = vsub.s32 %v898, %v900
          %v902 = vrot.slane %v895, %v901
          %v903 = vcombine.low %v802, %v809
          %v905 = vunpack.c.l.s4 1983009808
          %v906 = vunpack.c.0.s8 %v905
          %v907 = vlaneseq
          %v908 = vshrl.u32 %v907, 7
          %v909 = vsub.s32 %v906, %v908
          %v910 = vrot.slane %v903, %v909
          %v911 = vcombine.low %v812, %v813
          %v913 = vunpack.c.l.s4 1983009808
          %v914 = vunpack.c.0.s8 %v913
          %v915 = vlaneseq
          %v916 = vshrl.u32 %v915, 7
          %v917 = vsub.s32 %v914, %v916
          %v918 = vrot.slane %v911, %v917
          %v919 = vcombine.low %v894, %v902
          %v920 = vcombine.high %v894, %v902
          %v922 = vunpack.c.l.s4 1934713408
          %v923 = vunpack.c.0.s8 %v922
          %v924 = vlaneseq
          %v925 = vshrl.u32 %v924, 7
          %v926 = vsub.s32 %v923, %v925
          %v927 = vrot.slane %v919, %v926
          %v929 = vunpack.c.l.s4 1934713408
          %v930 = vunpack.c.0.s8 %v929
          %v931 = vlaneseq
          %v932 = vshrl.u32 %v931, 7
          %v933 = vsub.s32 %v930, %v932
          %v934 = vrot.slane %v920, %v933
          %v935 = vcombine.low %v910, %v918
          %v936 = vcombine.high %v910, %v918
          %v938 = vunpack.c.l.s4 1934713408
          %v939 = vunpack.c.0.s8 %v938
          %v940 = vlaneseq
          %v941 = vshrl.u32 %v940, 7
          %v942 = vsub.s32 %v939, %v941
          %v943 = vrot.slane %v935, %v942
          %v945 = vunpack.c.l.s4 1934713408
          %v946 = vunpack.c.0.s8 %v945
          %v947 = vlaneseq
          %v948 = vshrl.u32 %v947, 7
          %v949 = vsub.s32 %v946, %v948
          %v950 = vrot.slane %v936, %v949
          %v951 = vcombine.low %v927, %v943
          %v952 = vcombine.high %v927, %v943
          %v953 = vcombine.low %v934, %v950
          %v954 = vcombine.high %v934, %v950
          %955 = vst.msk [vmem:[#allocation3] sm:$0xff] %vm882, %v951
          %956 = vst.msk [vmem:[#allocation3 + $0x8] sm:$0xff] %vm882, %v952
          %957 = vst.msk [vmem:[#allocation3 + $0x10] sm:$0xff] %vm882, %v953
          %958 = vst.msk [vmem:[#allocation3 + $0x18] sm:$0xff] %vm882, %v954
        $region88: #{tpu_custom_call.1} parent=59 // pred_fallthru
          _
        %v959 = vld [vmem:[%s420] sm:$0xff]
        %v960 = vld [vmem:[#allocation9] sm:$0xff]
        %v961 = vld [vmem:[#allocation9 + $0x8] sm:$0xff]
        %v962 = vld [vmem:[#allocation9 + $0x10] sm:$0xff]
        %v963 = vld [vmem:[#allocation9 + $0x18] sm:$0xff]
        %v964 = vld [vmem:[%s3] sm:$0x1]
        %v966 = vlaneseq
        %v967 = vshrl.u32 %v966, 7
        %v968 = vsub.s32 0, %v967
        %v969 = vrot.slane %v964, %v968
        %vm971 = vcmask 261120
        %v973 = vsel %vm971, %v959, 0
        %975 = vmatprep.subr.mxu0 0.0
        %976 = vmatpush1.msra.mxu0 %v960
        %977 = vmatprep.subr.mxu0 0.0
        %978 = vmatpush1.msra.mxu0 %v961
        %979 = vmatprep.subr.mxu0 0.0
        %980 = vmatpush1.msra.mxu0 %v962
        %981 = vmatprep.subr.mxu0 0.0
        %982 = vmatpush1.msra.mxu0 %v963
        %983 = vmatprep.subr.mxu0 0.0
        %984 = vmatpush1.msra.mxu0 0.0
        %985 = vmatprep.subr.mxu0 0.0
        %986 = vmatpush1.msra.mxu0 0.0
        %987 = vmatprep.subr.mxu0 0.0
        %988 = vmatpush1.msra.mxu0 0.0
        %989 = vmatprep.subr.mxu0 0.0
        %990 = vmatpush1.msra.mxu0 0.0
        %991 = vmatprep.subr.mxu0 0.0
        %992 = vmatpush1.msra.mxu0 0.0
        %993 = vmatprep.subr.mxu0 0.0
        %994 = vmatpush1.msra.mxu0 0.0
        %995 = vmatprep.subr.mxu0 0.0
        %996 = vmatpush1.msra.mxu0 0.0
        %997 = vmatprep.subr.mxu0 0.0
        %998 = vmatpush1.msra.mxu0 0.0
        %999 = vmatprep.subr.mxu0 0.0
        %1000 = vmatpush1.msra.mxu0 0.0
        %1001 = vmatprep.subr.mxu0 0.0
        %1002 = vmatpush1.msra.mxu0 0.0
        %1003 = vmatprep.subr.mxu0 0.0
        %1004 = vmatpush1.msra.mxu0 0.0
        %1005 = vmatprep.subr.mxu0 0.0
        %1006 = vmatpush1.msra.mxu0 0.0
        %1007 = vmatprep.subr.mxu0 0.0
        %1008 = vmatpush1.msra.mxu0 0.0
        %1009 = vmatprep.subr.mxu0 0.0
        %1010 = vmatpush1.msra.mxu0 0.0
        %1011 = vmatprep.subr.mxu0 0.0
        %1012 = vmatpush1.msra.mxu0 0.0
        %1013 = vmatprep.subr.mxu0 0.0
        %1014 = vmatpush1.msra.mxu0 0.0
        %1015 = vmatprep.subr.mxu0 0.0
        %1016 = vmatpush1.msra.mxu0 0.0
        %1017 = vmatprep.subr.mxu0 0.0
        %1018 = vmatpush1.msra.mxu0 0.0
        %1019 = vmatprep.subr.mxu0 0.0
        %1020 = vmatpush1.msra.mxu0 0.0
        %1021 = vmatprep.subr.mxu0 0.0
        %1022 = vmatpush1.msra.mxu0 0.0
        %1023 = vmatprep.subr.mxu0 0.0
        %1024 = vmatpush1.msra.mxu0 0.0
        %1025 = vmatprep.subr.mxu0 0.0
        %1026 = vmatpush1.msra.mxu0 0.0
        %1027 = vmatprep.subr.mxu0 0.0
        %1028 = vmatpush1.msra.mxu0 0.0
        %1029 = vmatprep.subr.mxu0 0.0
        %1030 = vmatpush1.msra.mxu0 0.0
        %1031 = vmatprep.subr.mxu0 0.0
        %1032 = vmatpush1.msra.mxu0 0.0
        %1033 = vmatprep.subr.mxu0 0.0
        %1034 = vmatpush1.msra.mxu0 0.0
        %1035 = vmatprep.subr.mxu0 0.0
        %1036 = vmatpush1.msra.mxu0 0.0
        %1037 = vmatprep.subr.mxu0 0.0
        %1038 = vmatpush1.msra.mxu0 0.0
        %1039 = vmatprep.mubr.f32.mxu0 0.0
        %1040 = vmatmul.mubr.f32.gmra.mrb[0].mxu0 %v973
        %v1041 = vpop.f32.mrb[0].mxu0
        %v1042 = vadd.f32 %v969, %v1041
        %v1043 = vpop.f32.mrb[0].mxu0
        %1044 = vdwg.mxu0
        %v1045 = vmul.f32 %v1042, 0.35355338
        %1047 = vrot.lane.b32.xlu0 %v1045, 120
        %v1048 = vpop.permute.xlu0 %1047
        %1050 = vrot.lane.b32.xlu0 %v1045, 112
        %v1051 = vpop.permute.xlu0 %1050
        %1053 = vrot.lane.b32.xlu0 %v1045, 104
        %v1054 = vpop.permute.xlu0 %1053
        %v1056 = vcombine.low %v1045, %v1051
        %v1057 = vcombine.high %v1045, %v1051
        %v1059 = vunpack.c.l.s4 1983009808
        %v1060 = vunpack.c.0.s8 %v1059
        %v1061 = vlaneseq
        %v1062 = vshrl.u32 %v1061, 7
        %v1063 = vsub.s32 %v1060, %v1062
        %v1064 = vrot.slane %v1056, %v1063
        %v1066 = vunpack.c.l.s4 1983009808
        %v1067 = vunpack.c.0.s8 %v1066
        %v1068 = vlaneseq
        %v1069 = vshrl.u32 %v1068, 7
        %v1070 = vsub.s32 %v1067, %v1069
        %v1071 = vrot.slane %v1057, %v1070
        %v1072 = vcombine.low %v1048, %v1054
        %v1073 = vcombine.high %v1048, %v1054
        %v1075 = vunpack.c.l.s4 1983009808
        %v1076 = vunpack.c.0.s8 %v1075
        %v1077 = vlaneseq
        %v1078 = vshrl.u32 %v1077, 7
        %v1079 = vsub.s32 %v1076, %v1078
        %v1080 = vrot.slane %v1072, %v1079
        %v1082 = vunpack.c.l.s4 1983009808
        %v1083 = vunpack.c.0.s8 %v1082
        %v1084 = vlaneseq
        %v1085 = vshrl.u32 %v1084, 7
        %v1086 = vsub.s32 %v1083, %v1085
        %v1087 = vrot.slane %v1073, %v1086
        %v1088 = vcombine.low %v1064, %v1080
        %v1089 = vcombine.high %v1064, %v1080
        %v1091 = vunpack.c.l.s4 1934713408
        %v1092 = vunpack.c.0.s8 %v1091
        %v1093 = vlaneseq
        %v1094 = vshrl.u32 %v1093, 7
        %v1095 = vsub.s32 %v1092, %v1094
        %v1096 = vrot.slane %v1088, %v1095
        %v1098 = vunpack.c.l.s4 1934713408
        %v1099 = vunpack.c.0.s8 %v1098
        %v1100 = vlaneseq
        %v1101 = vshrl.u32 %v1100, 7
        %v1102 = vsub.s32 %v1099, %v1101
        %v1103 = vrot.slane %v1089, %v1102
        %v1104 = vcombine.low %v1071, %v1087
        %v1105 = vcombine.high %v1071, %v1087
        %v1107 = vunpack.c.l.s4 1934713408
        %v1108 = vunpack.c.0.s8 %v1107
        %v1109 = vlaneseq
        %v1110 = vshrl.u32 %v1109, 7
        %v1111 = vsub.s32 %v1108, %v1110
        %v1112 = vrot.slane %v1104, %v1111
        %v1114 = vunpack.c.l.s4 1934713408
        %v1115 = vunpack.c.0.s8 %v1114
        %v1116 = vlaneseq
        %v1117 = vshrl.u32 %v1116, 7
        %v1118 = vsub.s32 %v1115, %v1117
        %v1119 = vrot.slane %v1105, %v1118
        %v1120 = vcombine.high %v1096, 0.0
        %v1121 = vcombine.high %v1103, 0.0
        %v1122 = vcombine.high %v1112, 0.0
        %v1123 = vcombine.high %v1119, 0.0
        %v1124 = vcombine.low %v1096, %v1103
        %v1126 = vunpack.c.l.s4 1983009808
        %v1127 = vunpack.c.0.s8 %v1126
        %v1128 = vlaneseq
        %v1129 = vshrl.u32 %v1128, 7
        %v1130 = vsub.s32 %v1127, %v1129
        %v1131 = vrot.slane %v1124, %v1130
        %v1132 = vcombine.low %v1120, %v1121
        %v1134 = vunpack.c.l.s4 1983009808
        %v1135 = vunpack.c.0.s8 %v1134
        %v1136 = vlaneseq
        %v1137 = vshrl.u32 %v1136, 7
        %v1138 = vsub.s32 %v1135, %v1137
        %v1139 = vrot.slane %v1132, %v1138
        %v1140 = vcombine.low %v1112, %v1119
        %v1142 = vunpack.c.l.s4 1983009808
        %v1143 = vunpack.c.0.s8 %v1142
        %v1144 = vlaneseq
        %v1145 = vshrl.u32 %v1144, 7
        %v1146 = vsub.s32 %v1143, %v1145
        %v1147 = vrot.slane %v1140, %v1146
        %v1148 = vcombine.low %v1122, %v1123
        %v1150 = vunpack.c.l.s4 1983009808
        %v1151 = vunpack.c.0.s8 %v1150
        %v1152 = vlaneseq
        %v1153 = vshrl.u32 %v1152, 7
        %v1154 = vsub.s32 %v1151, %v1153
        %v1155 = vrot.slane %v1148, %v1154
        %v1156 = vcombine.low %v1131, %v1139
        %v1157 = vcombine.high %v1131, %v1139
        %v1159 = vunpack.c.l.s4 1934713408
        %v1160 = vunpack.c.0.s8 %v1159
        %v1161 = vlaneseq
        %v1162 = vshrl.u32 %v1161, 7
        %v1163 = vsub.s32 %v1160, %v1162
        %v1164 = vrot.slane %v1156, %v1163
        %v1166 = vunpack.c.l.s4 1934713408
        %v1167 = vunpack.c.0.s8 %v1166
        %v1168 = vlaneseq
        %v1169 = vshrl.u32 %v1168, 7
        %v1170 = vsub.s32 %v1167, %v1169
        %v1171 = vrot.slane %v1157, %v1170
        %v1172 = vcombine.low %v1147, %v1155
        %v1173 = vcombine.high %v1147, %v1155
        %v1175 = vunpack.c.l.s4 1934713408
        %v1176 = vunpack.c.0.s8 %v1175
        %v1177 = vlaneseq
        %v1178 = vshrl.u32 %v1177, 7
        %v1179 = vsub.s32 %v1176, %v1178
        %v1180 = vrot.slane %v1172, %v1179
        %v1182 = vunpack.c.l.s4 1934713408
        %v1183 = vunpack.c.0.s8 %v1182
        %v1184 = vlaneseq
        %v1185 = vshrl.u32 %v1184, 7
        %v1186 = vsub.s32 %v1183, %v1185
        %v1187 = vrot.slane %v1173, %v1186
        %v1188 = vcombine.low %v1164, %v1180
        %v1189 = vcombine.high %v1164, %v1180
        %v1190 = vcombine.low %v1171, %v1187
        %v1191 = vcombine.high %v1171, %v1187
        %v1192 = vld [vmem:[#allocation2] sm:$0xff]
        %v1193 = vld [vmem:[#allocation2 + $0x8] sm:$0xff]
        %v1194 = vld [vmem:[#allocation2 + $0x10] sm:$0xff]
        %v1195 = vld [vmem:[#allocation2 + $0x18] sm:$0xff]
        %v1196 = vld [vmem:[#allocation3] sm:$0xff]
        %v1197 = vld [vmem:[#allocation3 + $0x8] sm:$0xff]
        %v1198 = vld [vmem:[#allocation3 + $0x10] sm:$0xff]
        %v1199 = vld [vmem:[#allocation3 + $0x18] sm:$0xff]
        %vm1200 = vcmask 64512
        %v1202 = vsel %vm1200, %v1188, 0
        %v1205 = vsel %vm1200, %v1192, 0
        %1207 = vmatprep.subr.mxu0 0.0
        %1208 = vmatpush1.xpose.msra.mxu0 %v1205
        %1209 = vmatprep.subr.mxu0 0.0
        %1210 = vmatpush1.xpose.msra.mxu0 0.0
        %1211 = vmatprep.subr.mxu0 0.0
        %1212 = vmatpush1.xpose.msra.mxu0 0.0
        %1213 = vmatprep.subr.mxu0 0.0
        %1214 = vmatpush1.xpose.msra.mxu0 0.0
        %1215 = vmatprep.subr.mxu0 0.0
        %1216 = vmatpush1.xpose.msra.mxu0 0.0
        %1217 = vmatprep.subr.mxu0 0.0
        %1218 = vmatpush1.xpose.msra.mxu0 0.0
        %1219 = vmatprep.subr.mxu0 0.0
        %1220 = vmatpush1.xpose.msra.mxu0 0.0
        %1221 = vmatprep.subr.mxu0 0.0
        %1222 = vmatpush1.xpose.msra.mxu0 0.0
        %1223 = vmatprep.subr.mxu0 0.0
        %1224 = vmatpush1.xpose.msra.mxu0 0.0
        %1225 = vmatprep.subr.mxu0 0.0
        %1226 = vmatpush1.xpose.msra.mxu0 0.0
        %1227 = vmatprep.subr.mxu0 0.0
        %1228 = vmatpush1.xpose.msra.mxu0 0.0
        %1229 = vmatprep.subr.mxu0 0.0
        %1230 = vmatpush1.xpose.msra.mxu0 0.0
        %1231 = vmatprep.subr.mxu0 0.0
        %1232 = vmatpush1.xpose.msra.mxu0 0.0
        %1233 = vmatprep.subr.mxu0 0.0
        %1234 = vmatpush1.xpose.msra.mxu0 0.0
        %1235 = vmatprep.subr.mxu0 0.0
        %1236 = vmatpush1.xpose.msra.mxu0 0.0
        %1237 = vmatprep.subr.mxu0 0.0
        %1238 = vmatpush1.xpose.msra.mxu0 0.0
        %1239 = vmatprep.subr.mxu0 0.0
        %1240 = vmatpush1.xpose.msra.mxu0 0.0
        %1241 = vmatprep.subr.mxu0 0.0
        %1242 = vmatpush1.xpose.msra.mxu0 0.0
        %1243 = vmatprep.subr.mxu0 0.0
        %1244 = vmatpush1.xpose.msra.mxu0 0.0
        %1245 = vmatprep.subr.mxu0 0.0
        %1246 = vmatpush1.xpose.msra.mxu0 0.0
        %1247 = vmatprep.subr.mxu0 0.0
        %1248 = vmatpush1.xpose.msra.mxu0 0.0
        %1249 = vmatprep.subr.mxu0 0.0
        %1250 = vmatpush1.xpose.msra.mxu0 0.0
        %1251 = vmatprep.subr.mxu0 0.0
        %1252 = vmatpush1.xpose.msra.mxu0 0.0
        %1253 = vmatprep.subr.mxu0 0.0
        %1254 = vmatpush1.xpose.msra.mxu0 0.0
        %1255 = vmatprep.subr.mxu0 0.0
        %1256 = vmatpush1.xpose.msra.mxu0 0.0
        %1257 = vmatprep.subr.mxu0 0.0
        %1258 = vmatpush1.xpose.msra.mxu0 0.0
        %1259 = vmatprep.subr.mxu0 0.0
        %1260 = vmatpush1.xpose.msra.mxu0 0.0
        %1261 = vmatprep.subr.mxu0 0.0
        %1262 = vmatpush1.xpose.msra.mxu0 0.0
        %1263 = vmatprep.subr.mxu0 0.0
        %1264 = vmatpush1.xpose.msra.mxu0 0.0
        %1265 = vmatprep.subr.mxu0 0.0
        %1266 = vmatpush1.xpose.msra.mxu0 0.0
        %1267 = vmatprep.subr.mxu0 0.0
        %1268 = vmatpush1.xpose.msra.mxu0 0.0
        %1269 = vmatprep.subr.mxu0 0.0
        %1270 = vmatpush1.xpose.msra.mxu0 0.0
        %1271 = vmatprep.mubr.f32.mxu0 0.0
        %1272 = vmatmul.mubr.f32.gmra.mrb[0].mxu0 %v1202
        %v1273 = vpop.f32.mrb[0].mxu0
        %v1274 = vadd.f32 0.0, %v1273
        %v1275 = vpop.f32.mrb[0].mxu0
        %1276 = vdwg.mxu0
        %v1278 = vsel %vm1200, %v1189, 0
        %v1281 = vsel %vm1200, %v1193, 0
        %1283 = vmatprep.subr.mxu0 0.0
        %1284 = vmatpush1.xpose.msra.mxu0 %v1281
        %1285 = vmatprep.subr.mxu0 0.0
        %1286 = vmatpush1.xpose.msra.mxu0 0.0
        %1287 = vmatprep.subr.mxu0 0.0
        %1288 = vmatpush1.xpose.msra.mxu0 0.0
        %1289 = vmatprep.subr.mxu0 0.0
        %1290 = vmatpush1.xpose.msra.mxu0 0.0
        %1291 = vmatprep.subr.mxu0 0.0
        %1292 = vmatpush1.xpose.msra.mxu0 0.0
        %1293 = vmatprep.subr.mxu0 0.0
        %1294 = vmatpush1.xpose.msra.mxu0 0.0
        %1295 = vmatprep.subr.mxu0 0.0
        %1296 = vmatpush1.xpose.msra.mxu0 0.0
        %1297 = vmatprep.subr.mxu0 0.0
        %1298 = vmatpush1.xpose.msra.mxu0 0.0
        %1299 = vmatprep.subr.mxu0 0.0
        %1300 = vmatpush1.xpose.msra.mxu0 0.0
        %1301 = vmatprep.subr.mxu0 0.0
        %1302 = vmatpush1.xpose.msra.mxu0 0.0
        %1303 = vmatprep.subr.mxu0 0.0
        %1304 = vmatpush1.xpose.msra.mxu0 0.0
        %1305 = vmatprep.subr.mxu0 0.0
        %1306 = vmatpush1.xpose.msra.mxu0 0.0
        %1307 = vmatprep.subr.mxu0 0.0
        %1308 = vmatpush1.xpose.msra.mxu0 0.0
        %1309 = vmatprep.subr.mxu0 0.0
        %1310 = vmatpush1.xpose.msra.mxu0 0.0
        %1311 = vmatprep.subr.mxu0 0.0
        %1312 = vmatpush1.xpose.msra.mxu0 0.0
        %1313 = vmatprep.subr.mxu0 0.0
        %1314 = vmatpush1.xpose.msra.mxu0 0.0
        %1315 = vmatprep.subr.mxu0 0.0
        %1316 = vmatpush1.xpose.msra.mxu0 0.0
        %1317 = vmatprep.subr.mxu0 0.0
        %1318 = vmatpush1.xpose.msra.mxu0 0.0
        %1319 = vmatprep.subr.mxu0 0.0
        %1320 = vmatpush1.xpose.msra.mxu0 0.0
        %1321 = vmatprep.subr.mxu0 0.0
        %1322 = vmatpush1.xpose.msra.mxu0 0.0
        %1323 = vmatprep.subr.mxu0 0.0
        %1324 = vmatpush1.xpose.msra.mxu0 0.0
        %1325 = vmatprep.subr.mxu0 0.0
        %1326 = vmatpush1.xpose.msra.mxu0 0.0
        %1327 = vmatprep.subr.mxu0 0.0
        %1328 = vmatpush1.xpose.msra.mxu0 0.0
        %1329 = vmatprep.subr.mxu0 0.0
        %1330 = vmatpush1.xpose.msra.mxu0 0.0
        %1331 = vmatprep.subr.mxu0 0.0
        %1332 = vmatpush1.xpose.msra.mxu0 0.0
        %1333 = vmatprep.subr.mxu0 0.0
        %1334 = vmatpush1.xpose.msra.mxu0 0.0
        %1335 = vmatprep.subr.mxu0 0.0
        %1336 = vmatpush1.xpose.msra.mxu0 0.0
        %1337 = vmatprep.subr.mxu0 0.0
        %1338 = vmatpush1.xpose.msra.mxu0 0.0
        %1339 = vmatprep.subr.mxu0 0.0
        %1340 = vmatpush1.xpose.msra.mxu0 0.0
        %1341 = vmatprep.subr.mxu0 0.0
        %1342 = vmatpush1.xpose.msra.mxu0 0.0
        %1343 = vmatprep.subr.mxu0 0.0
        %1344 = vmatpush1.xpose.msra.mxu0 0.0
        %1345 = vmatprep.subr.mxu0 0.0
        %1346 = vmatpush1.xpose.msra.mxu0 0.0
        %1347 = vmatprep.mubr.f32.mxu0 0.0
        %1348 = vmatmul.mubr.f32.gmra.mrb[0].mxu0 %v1278
        %v1349 = vpop.f32.mrb[0].mxu0
        %v1350 = vadd.f32 0.0, %v1349
        %v1351 = vpop.f32.mrb[0].mxu0
        %1352 = vdwg.mxu0
        %v1354 = vsel %vm1200, %v1190, 0
        %v1357 = vsel %vm1200, %v1194, 0
        %1359 = vmatprep.subr.mxu0 0.0
        %1360 = vmatpush1.xpose.msra.mxu0 %v1357
        %1361 = vmatprep.subr.mxu0 0.0
        %1362 = vmatpush1.xpose.msra.mxu0 0.0
        %1363 = vmatprep.subr.mxu0 0.0
        %1364 = vmatpush1.xpose.msra.mxu0 0.0
        %1365 = vmatprep.subr.mxu0 0.0
        %1366 = vmatpush1.xpose.msra.mxu0 0.0
        %1367 = vmatprep.subr.mxu0 0.0
        %1368 = vmatpush1.xpose.msra.mxu0 0.0
        %1369 = vmatprep.subr.mxu0 0.0
        %1370 = vmatpush1.xpose.msra.mxu0 0.0
        %1371 = vmatprep.subr.mxu0 0.0
        %1372 = vmatpush1.xpose.msra.mxu0 0.0
        %1373 = vmatprep.subr.mxu0 0.0
        %1374 = vmatpush1.xpose.msra.mxu0 0.0
        %1375 = vmatprep.subr.mxu0 0.0
        %1376 = vmatpush1.xpose.msra.mxu0 0.0
        %1377 = vmatprep.subr.mxu0 0.0
        %1378 = vmatpush1.xpose.msra.mxu0 0.0
        %1379 = vmatprep.subr.mxu0 0.0
        %1380 = vmatpush1.xpose.msra.mxu0 0.0
        %1381 = vmatprep.subr.mxu0 0.0
        %1382 = vmatpush1.xpose.msra.mxu0 0.0
        %1383 = vmatprep.subr.mxu0 0.0
        %1384 = vmatpush1.xpose.msra.mxu0 0.0
        %1385 = vmatprep.subr.mxu0 0.0
        %1386 = vmatpush1.xpose.msra.mxu0 0.0
        %1387 = vmatprep.subr.mxu0 0.0
        %1388 = vmatpush1.xpose.msra.mxu0 0.0
        %1389 = vmatprep.subr.mxu0 0.0
        %1390 = vmatpush1.xpose.msra.mxu0 0.0
        %1391 = vmatprep.subr.mxu0 0.0
        %1392 = vmatpush1.xpose.msra.mxu0 0.0
        %1393 = vmatprep.subr.mxu0 0.0
        %1394 = vmatpush1.xpose.msra.mxu0 0.0
        %1395 = vmatprep.subr.mxu0 0.0
        %1396 = vmatpush1.xpose.msra.mxu0 0.0
        %1397 = vmatprep.subr.mxu0 0.0
        %1398 = vmatpush1.xpose.msra.mxu0 0.0
        %1399 = vmatprep.subr.mxu0 0.0
        %1400 = vmatpush1.xpose.msra.mxu0 0.0
        %1401 = vmatprep.subr.mxu0 0.0
        %1402 = vmatpush1.xpose.msra.mxu0 0.0
        %1403 = vmatprep.subr.mxu0 0.0
        %1404 = vmatpush1.xpose.msra.mxu0 0.0
        %1405 = vmatprep.subr.mxu0 0.0
        %1406 = vmatpush1.xpose.msra.mxu0 0.0
        %1407 = vmatprep.subr.mxu0 0.0
        %1408 = vmatpush1.xpose.msra.mxu0 0.0
        %1409 = vmatprep.subr.mxu0 0.0
        %1410 = vmatpush1.xpose.msra.mxu0 0.0
        %1411 = vmatprep.subr.mxu0 0.0
        %1412 = vmatpush1.xpose.msra.mxu0 0.0
        %1413 = vmatprep.subr.mxu0 0.0
        %1414 = vmatpush1.xpose.msra.mxu0 0.0
        %1415 = vmatprep.subr.mxu0 0.0
        %1416 = vmatpush1.xpose.msra.mxu0 0.0
        %1417 = vmatprep.subr.mxu0 0.0
        %1418 = vmatpush1.xpose.msra.mxu0 0.0
        %1419 = vmatprep.subr.mxu0 0.0
        %1420 = vmatpush1.xpose.msra.mxu0 0.0
        %1421 = vmatprep.subr.mxu0 0.0
        %1422 = vmatpush1.xpose.msra.mxu0 0.0
        %1423 = vmatprep.mubr.f32.mxu0 0.0
        %1424 = vmatmul.mubr.f32.gmra.mrb[0].mxu0 %v1354
        %v1425 = vpop.f32.mrb[0].mxu0
        %v1426 = vadd.f32 0.0, %v1425
        %v1427 = vpop.f32.mrb[0].mxu0
        %1428 = vdwg.mxu0
        %v1430 = vsel %vm1200, %v1191, 0
        %v1433 = vsel %vm1200, %v1195, 0
        %1435 = vmatprep.subr.mxu0 0.0
        %1436 = vmatpush1.xpose.msra.mxu0 %v1433
        %1437 = vmatprep.subr.mxu0 0.0
        %1438 = vmatpush1.xpose.msra.mxu0 0.0
        %1439 = vmatprep.subr.mxu0 0.0
        %1440 = vmatpush1.xpose.msra.mxu0 0.0
        %1441 = vmatprep.subr.mxu0 0.0
        %1442 = vmatpush1.xpose.msra.mxu0 0.0
        %1443 = vmatprep.subr.mxu0 0.0
        %1444 = vmatpush1.xpose.msra.mxu0 0.0
        %1445 = vmatprep.subr.mxu0 0.0
        %1446 = vmatpush1.xpose.msra.mxu0 0.0
        %1447 = vmatprep.subr.mxu0 0.0
        %1448 = vmatpush1.xpose.msra.mxu0 0.0
        %1449 = vmatprep.subr.mxu0 0.0
        %1450 = vmatpush1.xpose.msra.mxu0 0.0
        %1451 = vmatprep.subr.mxu0 0.0
        %1452 = vmatpush1.xpose.msra.mxu0 0.0
        %1453 = vmatprep.subr.mxu0 0.0
        %1454 = vmatpush1.xpose.msra.mxu0 0.0
        %1455 = vmatprep.subr.mxu0 0.0
        %1456 = vmatpush1.xpose.msra.mxu0 0.0
        %1457 = vmatprep.subr.mxu0 0.0
        %1458 = vmatpush1.xpose.msra.mxu0 0.0
        %1459 = vmatprep.subr.mxu0 0.0
        %1460 = vmatpush1.xpose.msra.mxu0 0.0
        %1461 = vmatprep.subr.mxu0 0.0
        %1462 = vmatpush1.xpose.msra.mxu0 0.0
        %1463 = vmatprep.subr.mxu0 0.0
        %1464 = vmatpush1.xpose.msra.mxu0 0.0
        %1465 = vmatprep.subr.mxu0 0.0
        %1466 = vmatpush1.xpose.msra.mxu0 0.0
        %1467 = vmatprep.subr.mxu0 0.0
        %1468 = vmatpush1.xpose.msra.mxu0 0.0
        %1469 = vmatprep.subr.mxu0 0.0
        %1470 = vmatpush1.xpose.msra.mxu0 0.0
        %1471 = vmatprep.subr.mxu0 0.0
        %1472 = vmatpush1.xpose.msra.mxu0 0.0
        %1473 = vmatprep.subr.mxu0 0.0
        %1474 = vmatpush1.xpose.msra.mxu0 0.0
        %1475 = vmatprep.subr.mxu0 0.0
        %1476 = vmatpush1.xpose.msra.mxu0 0.0
        %1477 = vmatprep.subr.mxu0 0.0
        %1478 = vmatpush1.xpose.msra.mxu0 0.0
        %1479 = vmatprep.subr.mxu0 0.0
        %1480 = vmatpush1.xpose.msra.mxu0 0.0
        %1481 = vmatprep.subr.mxu0 0.0
        %1482 = vmatpush1.xpose.msra.mxu0 0.0
        %1483 = vmatprep.subr.mxu0 0.0
        %1484 = vmatpush1.xpose.msra.mxu0 0.0
        %1485 = vmatprep.subr.mxu0 0.0
        %1486 = vmatpush1.xpose.msra.mxu0 0.0
        %1487 = vmatprep.subr.mxu0 0.0
        %1488 = vmatpush1.xpose.msra.mxu0 0.0
        %1489 = vmatprep.subr.mxu0 0.0
        %1490 = vmatpush1.xpose.msra.mxu0 0.0
        %1491 = vmatprep.subr.mxu0 0.0
        %1492 = vmatpush1.xpose.msra.mxu0 0.0
        %1493 = vmatprep.subr.mxu0 0.0
        %1494 = vmatpush1.xpose.msra.mxu0 0.0
        %1495 = vmatprep.subr.mxu0 0.0
        %1496 = vmatpush1.xpose.msra.mxu0 0.0
        %1497 = vmatprep.subr.mxu0 0.0
        %1498 = vmatpush1.xpose.msra.mxu0 0.0
        %1499 = vmatprep.mubr.f32.mxu0 0.0
        %1500 = vmatmul.mubr.f32.gmra.mrb[0].mxu0 %v1430
        %v1501 = vpop.f32.mrb[0].mxu0
        %v1502 = vadd.f32 0.0, %v1501
        %v1503 = vpop.f32.mrb[0].mxu0
        %1504 = vdwg.mxu0
        %v1505 = vsel %vm1200, %v1274, -inf
        %1506 = vmax.xlane.f32.xlu0 %v1505
        %v1507 = vpop.xlane.xlu0 %1506
        %v1508 = vsel %vm1200, %v1350, -inf
        %1509 = vmax.xlane.f32.xlu0 %v1508
        %v1510 = vpop.xlane.xlu0 %1509
        %v1511 = vsel %vm1200, %v1426, -inf
        %1512 = vmax.xlane.f32.xlu0 %v1511
        %v1513 = vpop.xlane.xlu0 %1512
        %v1514 = vsel %vm1200, %v1502, -inf
        %1515 = vmax.xlane.f32.xlu0 %v1514
        %v1516 = vpop.xlane.xlu0 %1515
        %v1517 = vsub.f32 %v1274, %v1507
        %v1518 = vsub.f32 %v1350, %v1510
        %v1519 = vsub.f32 %v1426, %v1513
        %v1520 = vsub.f32 %v1502, %v1516
        %v1521 = vmul.f32 %v1517, 1.442695
        %v1522 = vpow.pop %v1521
        %v1523 = vmul.f32 %v1518, 1.442695
        %v1524 = vpow.pop %v1523
        %v1525 = vmul.f32 %v1519, 1.442695
        %v1526 = vpow.pop %v1525
        %v1527 = vmul.f32 %v1520, 1.442695
        %v1528 = vpow.pop %v1527
        %v1529 = vsel %vm1200, %v1522, 0.0
        %1530 = vadd.xlane.f32.xlu0 %v1529
        %v1531 = vpop.xlane.xlu0 %1530
        %v1532 = vsel %vm1200, %v1524, 0.0
        %1533 = vadd.xlane.f32.xlu0 %v1532
        %v1534 = vpop.xlane.xlu0 %1533
        %v1535 = vsel %vm1200, %v1526, 0.0
        %1536 = vadd.xlane.f32.xlu0 %v1535
        %v1537 = vpop.xlane.xlu0 %1536
        %v1538 = vsel %vm1200, %v1528, 0.0
        %1539 = vadd.xlane.f32.xlu0 %v1538
        %v1540 = vpop.xlane.xlu0 %1539
        %v1541 = vrcp.pop %v1531
        %v1542 = vrcp.pop %v1534
        %v1543 = vrcp.pop %v1537
        %v1544 = vrcp.pop %v1540
        %v1545 = vmul.f32 %v1522, %v1541
        %v1546 = vmul.f32 %v1524, %v1542
        %v1547 = vmul.f32 %v1526, %v1543
        %v1548 = vmul.f32 %v1528, %v1544
        %v1550 = vsel %vm1200, %v1545, 0
        %1552 = vmatprep.subr.mxu0 0.0
        %1553 = vmatpush1.msra.mxu0 %v1196
        %1554 = vmatprep.subr.mxu0 0.0
        %1555 = vmatpush1.msra.mxu0 0.0
        %1556 = vmatprep.subr.mxu0 0.0
        %1557 = vmatpush1.msra.mxu0 0.0
        %1558 = vmatprep.subr.mxu0 0.0
        %1559 = vmatpush1.msra.mxu0 0.0
        %1560 = vmatprep.subr.mxu0 0.0
        %1561 = vmatpush1.msra.mxu0 0.0
        %1562 = vmatprep.subr.mxu0 0.0
        %1563 = vmatpush1.msra.mxu0 0.0
        %1564 = vmatprep.subr.mxu0 0.0
        %1565 = vmatpush1.msra.mxu0 0.0
        %1566 = vmatprep.subr.mxu0 0.0
        %1567 = vmatpush1.msra.mxu0 0.0
        %1568 = vmatprep.subr.mxu0 0.0
        %1569 = vmatpush1.msra.mxu0 0.0
        %1570 = vmatprep.subr.mxu0 0.0
        %1571 = vmatpush1.msra.mxu0 0.0
        %1572 = vmatprep.subr.mxu0 0.0
        %1573 = vmatpush1.msra.mxu0 0.0
        %1574 = vmatprep.subr.mxu0 0.0
        %1575 = vmatpush1.msra.mxu0 0.0
        %1576 = vmatprep.subr.mxu0 0.0
        %1577 = vmatpush1.msra.mxu0 0.0
        %1578 = vmatprep.subr.mxu0 0.0
        %1579 = vmatpush1.msra.mxu0 0.0
        %1580 = vmatprep.subr.mxu0 0.0
        %1581 = vmatpush1.msra.mxu0 0.0
        %1582 = vmatprep.subr.mxu0 0.0
        %1583 = vmatpush1.msra.mxu0 0.0
        %1584 = vmatprep.subr.mxu0 0.0
        %1585 = vmatpush1.msra.mxu0 0.0
        %1586 = vmatprep.subr.mxu0 0.0
        %1587 = vmatpush1.msra.mxu0 0.0
        %1588 = vmatprep.subr.mxu0 0.0
        %1589 = vmatpush1.msra.mxu0 0.0
        %1590 = vmatprep.subr.mxu0 0.0
        %1591 = vmatpush1.msra.mxu0 0.0
        %1592 = vmatprep.subr.mxu0 0.0
        %1593 = vmatpush1.msra.mxu0 0.0
        %1594 = vmatprep.subr.mxu0 0.0
        %1595 = vmatpush1.msra.mxu0 0.0
        %1596 = vmatprep.subr.mxu0 0.0
        %1597 = vmatpush1.msra.mxu0 0.0
        %1598 = vmatprep.subr.mxu0 0.0
        %1599 = vmatpush1.msra.mxu0 0.0
        %1600 = vmatprep.subr.mxu0 0.0
        %1601 = vmatpush1.msra.mxu0 0.0
        %1602 = vmatprep.subr.mxu0 0.0
        %1603 = vmatpush1.msra.mxu0 0.0
        %1604 = vmatprep.subr.mxu0 0.0
        %1605 = vmatpush1.msra.mxu0 0.0
        %1606 = vmatprep.subr.mxu0 0.0
        %1607 = vmatpush1.msra.mxu0 0.0
        %1608 = vmatprep.subr.mxu0 0.0
        %1609 = vmatpush1.msra.mxu0 0.0
        %1610 = vmatprep.subr.mxu0 0.0
        %1611 = vmatpush1.msra.mxu0 0.0
        %1612 = vmatprep.subr.mxu0 0.0
        %1613 = vmatpush1.msra.mxu0 0.0
        %1614 = vmatprep.subr.mxu0 0.0
        %1615 = vmatpush1.msra.mxu0 0.0
        %1616 = vmatprep.mubr.f32.mxu0 0.0
        %1617 = vmatmul.mubr.f32.gmra.mrb[0].mxu0 %v1550
        %v1618 = vpop.f32.mrb[0].mxu0
        %v1619 = vadd.f32 0.0, %v1618
        %v1620 = vpop.f32.mrb[0].mxu0
        %1621 = vdwg.mxu0
        %v1623 = vsel %vm1200, %v1546, 0
        %1625 = vmatprep.subr.mxu0 0.0
        %1626 = vmatpush1.msra.mxu0 %v1197
        %1627 = vmatprep.subr.mxu0 0.0
        %1628 = vmatpush1.msra.mxu0 0.0
        %1629 = vmatprep.subr.mxu0 0.0
        %1630 = vmatpush1.msra.mxu0 0.0
        %1631 = vmatprep.subr.mxu0 0.0
        %1632 = vmatpush1.msra.mxu0 0.0
        %1633 = vmatprep.subr.mxu0 0.0
        %1634 = vmatpush1.msra.mxu0 0.0
        %1635 = vmatprep.subr.mxu0 0.0
        %1636 = vmatpush1.msra.mxu0 0.0
        %1637 = vmatprep.subr.mxu0 0.0
        %1638 = vmatpush1.msra.mxu0 0.0
        %1639 = vmatprep.subr.mxu0 0.0
        %1640 = vmatpush1.msra.mxu0 0.0
        %1641 = vmatprep.subr.mxu0 0.0
        %1642 = vmatpush1.msra.mxu0 0.0
        %1643 = vmatprep.subr.mxu0 0.0
        %1644 = vmatpush1.msra.mxu0 0.0
        %1645 = vmatprep.subr.mxu0 0.0
        %1646 = vmatpush1.msra.mxu0 0.0
        %1647 = vmatprep.subr.mxu0 0.0
        %1648 = vmatpush1.msra.mxu0 0.0
        %1649 = vmatprep.subr.mxu0 0.0
        %1650 = vmatpush1.msra.mxu0 0.0
        %1651 = vmatprep.subr.mxu0 0.0
        %1652 = vmatpush1.msra.mxu0 0.0
        %1653 = vmatprep.subr.mxu0 0.0
        %1654 = vmatpush1.msra.mxu0 0.0
        %1655 = vmatprep.subr.mxu0 0.0
        %1656 = vmatpush1.msra.mxu0 0.0
        %1657 = vmatprep.subr.mxu0 0.0
        %1658 = vmatpush1.msra.mxu0 0.0
        %1659 = vmatprep.subr.mxu0 0.0
        %1660 = vmatpush1.msra.mxu0 0.0
        %1661 = vmatprep.subr.mxu0 0.0
        %1662 = vmatpush1.msra.mxu0 0.0
        %1663 = vmatprep.subr.mxu0 0.0
        %1664 = vmatpush1.msra.mxu0 0.0
        %1665 = vmatprep.subr.mxu0 0.0
        %1666 = vmatpush1.msra.mxu0 0.0
        %1667 = vmatprep.subr.mxu0 0.0
        %1668 = vmatpush1.msra.mxu0 0.0
        %1669 = vmatprep.subr.mxu0 0.0
        %1670 = vmatpush1.msra.mxu0 0.0
        %1671 = vmatprep.subr.mxu0 0.0
        %1672 = vmatpush1.msra.mxu0 0.0
        %1673 = vmatprep.subr.mxu0 0.0
        %1674 = vmatpush1.msra.mxu0 0.0
        %1675 = vmatprep.subr.mxu0 0.0
        %1676 = vmatpush1.msra.mxu0 0.0
        %1677 = vmatprep.subr.mxu0 0.0
        %1678 = vmatpush1.msra.mxu0 0.0
        %1679 = vmatprep.subr.mxu0 0.0
        %1680 = vmatpush1.msra.mxu0 0.0
        %1681 = vmatprep.subr.mxu0 0.0
        %1682 = vmatpush1.msra.mxu0 0.0
        %1683 = vmatprep.subr.mxu0 0.0
        %1684 = vmatpush1.msra.mxu0 0.0
        %1685 = vmatprep.subr.mxu0 0.0
        %1686 = vmatpush1.msra.mxu0 0.0
        %1687 = vmatprep.subr.mxu0 0.0
        %1688 = vmatpush1.msra.mxu0 0.0
        %1689 = vmatprep.mubr.f32.mxu0 0.0
        %1690 = vmatmul.mubr.f32.gmra.mrb[0].mxu0 %v1623
        %v1691 = vpop.f32.mrb[0].mxu0
        %v1692 = vadd.f32 0.0, %v1691
        %v1693 = vpop.f32.mrb[0].mxu0
        %1694 = vdwg.mxu0
        %v1696 = vsel %vm1200, %v1547, 0
        %1698 = vmatprep.subr.mxu0 0.0
        %1699 = vmatpush1.msra.mxu0 %v1198
        %1700 = vmatprep.subr.mxu0 0.0
        %1701 = vmatpush1.msra.mxu0 0.0
        %1702 = vmatprep.subr.mxu0 0.0
        %1703 = vmatpush1.msra.mxu0 0.0
        %1704 = vmatprep.subr.mxu0 0.0
        %1705 = vmatpush1.msra.mxu0 0.0
        %1706 = vmatprep.subr.mxu0 0.0
        %1707 = vmatpush1.msra.mxu0 0.0
        %1708 = vmatprep.subr.mxu0 0.0
        %1709 = vmatpush1.msra.mxu0 0.0
        %1710 = vmatprep.subr.mxu0 0.0
        %1711 = vmatpush1.msra.mxu0 0.0
        %1712 = vmatprep.subr.mxu0 0.0
        %1713 = vmatpush1.msra.mxu0 0.0
        %1714 = vmatprep.subr.mxu0 0.0
        %1715 = vmatpush1.msra.mxu0 0.0
        %1716 = vmatprep.subr.mxu0 0.0
        %1717 = vmatpush1.msra.mxu0 0.0
        %1718 = vmatprep.subr.mxu0 0.0
        %1719 = vmatpush1.msra.mxu0 0.0
        %1720 = vmatprep.subr.mxu0 0.0
        %1721 = vmatpush1.msra.mxu0 0.0
        %1722 = vmatprep.subr.mxu0 0.0
        %1723 = vmatpush1.msra.mxu0 0.0
        %1724 = vmatprep.subr.mxu0 0.0
        %1725 = vmatpush1.msra.mxu0 0.0
        %1726 = vmatprep.subr.mxu0 0.0
        %1727 = vmatpush1.msra.mxu0 0.0
        %1728 = vmatprep.subr.mxu0 0.0
        %1729 = vmatpush1.msra.mxu0 0.0
        %1730 = vmatprep.subr.mxu0 0.0
        %1731 = vmatpush1.msra.mxu0 0.0
        %1732 = vmatprep.subr.mxu0 0.0
        %1733 = vmatpush1.msra.mxu0 0.0
        %1734 = vmatprep.subr.mxu0 0.0
        %1735 = vmatpush1.msra.mxu0 0.0
        %1736 = vmatprep.subr.mxu0 0.0
        %1737 = vmatpush1.msra.mxu0 0.0
        %1738 = vmatprep.subr.mxu0 0.0
        %1739 = vmatpush1.msra.mxu0 0.0
        %1740 = vmatprep.subr.mxu0 0.0
        %1741 = vmatpush1.msra.mxu0 0.0
        %1742 = vmatprep.subr.mxu0 0.0
        %1743 = vmatpush1.msra.mxu0 0.0
        %1744 = vmatprep.subr.mxu0 0.0
        %1745 = vmatpush1.msra.mxu0 0.0
        %1746 = vmatprep.subr.mxu0 0.0
        %1747 = vmatpush1.msra.mxu0 0.0
        %1748 = vmatprep.subr.mxu0 0.0
        %1749 = vmatpush1.msra.mxu0 0.0
        %1750 = vmatprep.subr.mxu0 0.0
        %1751 = vmatpush1.msra.mxu0 0.0
        %1752 = vmatprep.subr.mxu0 0.0
        %1753 = vmatpush1.msra.mxu0 0.0
        %1754 = vmatprep.subr.mxu0 0.0
        %1755 = vmatpush1.msra.mxu0 0.0
        %1756 = vmatprep.subr.mxu0 0.0
        %1757 = vmatpush1.msra.mxu0 0.0
        %1758 = vmatprep.subr.mxu0 0.0
        %1759 = vmatpush1.msra.mxu0 0.0
        %1760 = vmatprep.subr.mxu0 0.0
        %1761 = vmatpush1.msra.mxu0 0.0
        %1762 = vmatprep.mubr.f32.mxu0 0.0
        %1763 = vmatmul.mubr.f32.gmra.mrb[0].mxu0 %v1696
        %v1764 = vpop.f32.mrb[0].mxu0
        %v1765 = vadd.f32 0.0, %v1764
        %v1766 = vpop.f32.mrb[0].mxu0
        %1767 = vdwg.mxu0
        %v1769 = vsel %vm1200, %v1548, 0
        %1771 = vmatprep.subr.mxu0 0.0
        %1772 = vmatpush1.msra.mxu0 %v1199
        %1773 = vmatprep.subr.mxu0 0.0
        %1774 = vmatpush1.msra.mxu0 0.0
        %1775 = vmatprep.subr.mxu0 0.0
        %1776 = vmatpush1.msra.mxu0 0.0
        %1777 = vmatprep.subr.mxu0 0.0
        %1778 = vmatpush1.msra.mxu0 0.0
        %1779 = vmatprep.subr.mxu0 0.0
        %1780 = vmatpush1.msra.mxu0 0.0
        %1781 = vmatprep.subr.mxu0 0.0
        %1782 = vmatpush1.msra.mxu0 0.0
        %1783 = vmatprep.subr.mxu0 0.0
        %1784 = vmatpush1.msra.mxu0 0.0
        %1785 = vmatprep.subr.mxu0 0.0
        %1786 = vmatpush1.msra.mxu0 0.0
        %1787 = vmatprep.subr.mxu0 0.0
        %1788 = vmatpush1.msra.mxu0 0.0
        %1789 = vmatprep.subr.mxu0 0.0
        %1790 = vmatpush1.msra.mxu0 0.0
        %1791 = vmatprep.subr.mxu0 0.0
        %1792 = vmatpush1.msra.mxu0 0.0
        %1793 = vmatprep.subr.mxu0 0.0
        %1794 = vmatpush1.msra.mxu0 0.0
        %1795 = vmatprep.subr.mxu0 0.0
        %1796 = vmatpush1.msra.mxu0 0.0
        %1797 = vmatprep.subr.mxu0 0.0
        %1798 = vmatpush1.msra.mxu0 0.0
        %1799 = vmatprep.subr.mxu0 0.0
        %1800 = vmatpush1.msra.mxu0 0.0
        %1801 = vmatprep.subr.mxu0 0.0
        %1802 = vmatpush1.msra.mxu0 0.0
        %1803 = vmatprep.subr.mxu0 0.0
        %1804 = vmatpush1.msra.mxu0 0.0
        %1805 = vmatprep.subr.mxu0 0.0
        %1806 = vmatpush1.msra.mxu0 0.0
        %1807 = vmatprep.subr.mxu0 0.0
        %1808 = vmatpush1.msra.mxu0 0.0
        %1809 = vmatprep.subr.mxu0 0.0
        %1810 = vmatpush1.msra.mxu0 0.0
        %1811 = vmatprep.subr.mxu0 0.0
        %1812 = vmatpush1.msra.mxu0 0.0
        %1813 = vmatprep.subr.mxu0 0.0
        %1814 = vmatpush1.msra.mxu0 0.0
        %1815 = vmatprep.subr.mxu0 0.0
        %1816 = vmatpush1.msra.mxu0 0.0
        %1817 = vmatprep.subr.mxu0 0.0
        %1818 = vmatpush1.msra.mxu0 0.0
        %1819 = vmatprep.subr.mxu0 0.0
        %1820 = vmatpush1.msra.mxu0 0.0
        %1821 = vmatprep.subr.mxu0 0.0
        %1822 = vmatpush1.msra.mxu0 0.0
        %1823 = vmatprep.subr.mxu0 0.0
        %1824 = vmatpush1.msra.mxu0 0.0
        %1825 = vmatprep.subr.mxu0 0.0
        %1826 = vmatpush1.msra.mxu0 0.0
        %1827 = vmatprep.subr.mxu0 0.0
        %1828 = vmatpush1.msra.mxu0 0.0
        %1829 = vmatprep.subr.mxu0 0.0
        %1830 = vmatpush1.msra.mxu0 0.0
        %1831 = vmatprep.subr.mxu0 0.0
        %1832 = vmatpush1.msra.mxu0 0.0
        %1833 = vmatprep.subr.mxu0 0.0
        %1834 = vmatpush1.msra.mxu0 0.0
        %1835 = vmatprep.mubr.f32.mxu0 0.0
        %1836 = vmatmul.mubr.f32.gmra.mrb[0].mxu0 %v1769
        %v1837 = vpop.f32.mrb[0].mxu0
        %v1838 = vadd.f32 0.0, %v1837
        %v1839 = vpop.f32.mrb[0].mxu0
        %1840 = vdwg.mxu0
        %v1841 = vcombine.low %v1619, %v1765
        %v1842 = vcombine.high %v1619, %v1765
        %v1844 = vunpack.c.l.s4 1983009808
        %v1845 = vunpack.c.0.s8 %v1844
        %v1846 = vlaneseq
        %v1847 = vshrl.u32 %v1846, 7
        %v1848 = vsub.s32 %v1845, %v1847
        %v1849 = vrot.slane %v1841, %v1848
        %v1851 = vunpack.c.l.s4 1983009808
        %v1852 = vunpack.c.0.s8 %v1851
        %v1853 = vlaneseq
        %v1854 = vshrl.u32 %v1853, 7
        %v1855 = vsub.s32 %v1852, %v1854
        %v1856 = vrot.slane %v1842, %v1855
        %v1857 = vcombine.low %v1692, %v1838
        %v1858 = vcombine.high %v1692, %v1838
        %v1860 = vunpack.c.l.s4 1983009808
        %v1861 = vunpack.c.0.s8 %v1860
        %v1862 = vlaneseq
        %v1863 = vshrl.u32 %v1862, 7
        %v1864 = vsub.s32 %v1861, %v1863
        %v1865 = vrot.slane %v1857, %v1864
        %v1867 = vunpack.c.l.s4 1983009808
        %v1868 = vunpack.c.0.s8 %v1867
        %v1869 = vlaneseq
        %v1870 = vshrl.u32 %v1869, 7
        %v1871 = vsub.s32 %v1868, %v1870
        %v1872 = vrot.slane %v1858, %v1871
        %v1873 = vcombine.low %v1849, %v1865
        %v1874 = vcombine.high %v1849, %v1865
        %v1876 = vunpack.c.l.s4 1934713408
        %v1877 = vunpack.c.0.s8 %v1876
        %v1878 = vlaneseq
        %v1879 = vshrl.u32 %v1878, 7
        %v1880 = vsub.s32 %v1877, %v1879
        %v1881 = vrot.slane %v1873, %v1880
        %v1883 = vunpack.c.l.s4 1934713408
        %v1884 = vunpack.c.0.s8 %v1883
        %v1885 = vlaneseq
        %v1886 = vshrl.u32 %v1885, 7
        %v1887 = vsub.s32 %v1884, %v1886
        %v1888 = vrot.slane %v1874, %v1887
        %v1889 = vcombine.low %v1856, %v1872
        %v1890 = vcombine.high %v1856, %v1872
        %v1892 = vunpack.c.l.s4 1934713408
        %v1893 = vunpack.c.0.s8 %v1892
        %v1894 = vlaneseq
        %v1895 = vshrl.u32 %v1894, 7
        %v1896 = vsub.s32 %v1893, %v1895
        %v1897 = vrot.slane %v1889, %v1896
        %v1899 = vunpack.c.l.s4 1934713408
        %v1900 = vunpack.c.0.s8 %v1899
        %v1901 = vlaneseq
        %v1902 = vshrl.u32 %v1901, 7
        %v1903 = vsub.s32 %v1900, %v1902
        %v1904 = vrot.slane %v1890, %v1903
        %v1905 = vcombine.high %v1881, 0.0
        %v1906 = vcombine.high %v1888, 0.0
        %v1907 = vcombine.high %v1897, 0.0
        %v1908 = vcombine.high %v1904, 0.0
        %v1909 = vcombine.low %v1881, %v1888
        %v1911 = vunpack.c.l.s4 1983009808
        %v1912 = vunpack.c.0.s8 %v1911
        %v1913 = vlaneseq
        %v1914 = vshrl.u32 %v1913, 7
        %v1915 = vsub.s32 %v1912, %v1914
        %v1916 = vrot.slane %v1909, %v1915
        %v1917 = vcombine.low %v1905, %v1906
        %v1919 = vunpack.c.l.s4 1983009808
        %v1920 = vunpack.c.0.s8 %v1919
        %v1921 = vlaneseq
        %v1922 = vshrl.u32 %v1921, 7
        %v1923 = vsub.s32 %v1920, %v1922
        %v1924 = vrot.slane %v1917, %v1923
        %v1925 = vcombine.low %v1897, %v1904
        %v1927 = vunpack.c.l.s4 1983009808
        %v1928 = vunpack.c.0.s8 %v1927
        %v1929 = vlaneseq
        %v1930 = vshrl.u32 %v1929, 7
        %v1931 = vsub.s32 %v1928, %v1930
        %v1932 = vrot.slane %v1925, %v1931
        %v1933 = vcombine.low %v1907, %v1908
        %v1935 = vunpack.c.l.s4 1983009808
        %v1936 = vunpack.c.0.s8 %v1935
        %v1937 = vlaneseq
        %v1938 = vshrl.u32 %v1937, 7
        %v1939 = vsub.s32 %v1936, %v1938
        %v1940 = vrot.slane %v1933, %v1939
        %v1941 = vcombine.low %v1916, %v1924
        %v1942 = vcombine.high %v1916, %v1924
        %v1944 = vunpack.c.l.s4 1934713408
        %v1945 = vunpack.c.0.s8 %v1944
        %v1946 = vlaneseq
        %v1947 = vshrl.u32 %v1946, 7
        %v1948 = vsub.s32 %v1945, %v1947
        %v1949 = vrot.slane %v1941, %v1948
        %v1951 = vunpack.c.l.s4 1934713408
        %v1952 = vunpack.c.0.s8 %v1951
        %v1953 = vlaneseq
        %v1954 = vshrl.u32 %v1953, 7
        %v1955 = vsub.s32 %v1952, %v1954
        %v1956 = vrot.slane %v1942, %v1955
        %v1957 = vcombine.low %v1932, %v1940
        %v1958 = vcombine.high %v1932, %v1940
        %v1960 = vunpack.c.l.s4 1934713408
        %v1961 = vunpack.c.0.s8 %v1960
        %v1962 = vlaneseq
        %v1963 = vshrl.u32 %v1962, 7
        %v1964 = vsub.s32 %v1961, %v1963
        %v1965 = vrot.slane %v1957, %v1964
        %v1967 = vunpack.c.l.s4 1934713408
        %v1968 = vunpack.c.0.s8 %v1967
        %v1969 = vlaneseq
        %v1970 = vshrl.u32 %v1969, 7
        %v1971 = vsub.s32 %v1968, %v1970
        %v1972 = vrot.slane %v1958, %v1971
        %v1973 = vcombine.low %v1949, %v1965
        %v1974 = vcombine.high %v1949, %v1965
        %v1975 = vcombine.low %v1956, %v1972
        %v1976 = vcombine.high %v1956, %v1972
        %1978 = vrot.lane.b32.xlu0 %v1974, 8
        %v1979 = vpop.permute.xlu0 %1978
        %1982 = vrot.lane.b32.xlu0 %v1975, 16
        %v1983 = vpop.permute.xlu0 %1982
        %1986 = vrot.lane.b32.xlu0 %v1976, 24
        %v1987 = vpop.permute.xlu0 %1986
        %v1989 = vsel %vm1200, %v1973, %v1979
        %vm1990 = vcmask 130048
        %v1991 = vsel %vm1990, %v1989, %v1983
        %vm1992 = vcmask 195584
        %v1993 = vsel %vm1992, %v1991, %v1987
        %v1994 = vld [vmem:[#allocation13] sm:$0xff]
        %v1995 = vld [vmem:[#allocation13 + $0x8] sm:$0xff]
        %v1996 = vld [vmem:[#allocation13 + $0x10] sm:$0xff]
        %v1997 = vld [vmem:[#allocation13 + $0x18] sm:$0xff]
        %v1998 = vld [vmem:[%s9] sm:$0x1]
        %v2000 = vlaneseq
        %v2001 = vshrl.u32 %v2000, 7
        %v2002 = vsub.s32 0, %v2001
        %v2003 = vrot.slane %v1998, %v2002
        %v2006 = vsel %vm971, %v1993, 0
        %2008 = vmatprep.subr.mxu0 0.0
        %2009 = vmatpush1.msra.mxu0 %v1994
        %2010 = vmatprep.subr.mxu0 0.0
        %2011 = vmatpush1.msra.mxu0 %v1995
        %2012 = vmatprep.subr.mxu0 0.0
        %2013 = vmatpush1.msra.mxu0 %v1996
        %2014 = vmatprep.subr.mxu0 0.0
        %2015 = vmatpush1.msra.mxu0 %v1997
        %2016 = vmatprep.subr.mxu0 0.0
        %2017 = vmatpush1.msra.mxu0 0.0
        %2018 = vmatprep.subr.mxu0 0.0
        %2019 = vmatpush1.msra.mxu0 0.0
        %2020 = vmatprep.subr.mxu0 0.0
        %2021 = vmatpush1.msra.mxu0 0.0
        %2022 = vmatprep.subr.mxu0 0.0
        %2023 = vmatpush1.msra.mxu0 0.0
        %2024 = vmatprep.subr.mxu0 0.0
        %2025 = vmatpush1.msra.mxu0 0.0
        %2026 = vmatprep.subr.mxu0 0.0
        %2027 = vmatpush1.msra.mxu0 0.0
        %2028 = vmatprep.subr.mxu0 0.0
        %2029 = vmatpush1.msra.mxu0 0.0
        %2030 = vmatprep.subr.mxu0 0.0
        %2031 = vmatpush1.msra.mxu0 0.0
        %2032 = vmatprep.subr.mxu0 0.0
        %2033 = vmatpush1.msra.mxu0 0.0
        %2034 = vmatprep.subr.mxu0 0.0
        %2035 = vmatpush1.msra.mxu0 0.0
        %2036 = vmatprep.subr.mxu0 0.0
        %2037 = vmatpush1.msra.mxu0 0.0
        %2038 = vmatprep.subr.mxu0 0.0
        %2039 = vmatpush1.msra.mxu0 0.0
        %2040 = vmatprep.subr.mxu0 0.0
        %2041 = vmatpush1.msra.mxu0 0.0
        %2042 = vmatprep.subr.mxu0 0.0
        %2043 = vmatpush1.msra.mxu0 0.0
        %2044 = vmatprep.subr.mxu0 0.0
        %2045 = vmatpush1.msra.mxu0 0.0
        %2046 = vmatprep.subr.mxu0 0.0
        %2047 = vmatpush1.msra.mxu0 0.0
        %2048 = vmatprep.subr.mxu0 0.0
        %2049 = vmatpush1.msra.mxu0 0.0
        %2050 = vmatprep.subr.mxu0 0.0
        %2051 = vmatpush1.msra.mxu0 0.0
        %2052 = vmatprep.subr.mxu0 0.0
        %2053 = vmatpush1.msra.mxu0 0.0
        %2054 = vmatprep.subr.mxu0 0.0
        %2055 = vmatpush1.msra.mxu0 0.0
        %2056 = vmatprep.subr.mxu0 0.0
        %2057 = vmatpush1.msra.mxu0 0.0
        %2058 = vmatprep.subr.mxu0 0.0
        %2059 = vmatpush1.msra.mxu0 0.0
        %2060 = vmatprep.subr.mxu0 0.0
        %2061 = vmatpush1.msra.mxu0 0.0
        %2062 = vmatprep.subr.mxu0 0.0
        %2063 = vmatpush1.msra.mxu0 0.0
        %2064 = vmatprep.subr.mxu0 0.0
        %2065 = vmatpush1.msra.mxu0 0.0
        %2066 = vmatprep.subr.mxu0 0.0
        %2067 = vmatpush1.msra.mxu0 0.0
        %2068 = vmatprep.subr.mxu0 0.0
        %2069 = vmatpush1.msra.mxu0 0.0
        %2070 = vmatprep.subr.mxu0 0.0
        %2071 = vmatpush1.msra.mxu0 0.0
        %2072 = vmatprep.mubr.f32.mxu0 0.0
        %2073 = vmatmul.mubr.f32.gmra.mrb[0].mxu0 %v2006
        %v2074 = vpop.f32.mrb[0].mxu0
        %v2075 = vadd.f32 %v2003, %v2074
        %v2076 = vpop.f32.mrb[0].mxu0
        %2077 = vdwg.mxu0
        %2078 = vst.msk [vmem:[%s486] sm:$0xff] %vm971, %v2075
        %s2079 = sand.u32 %s276, 1
        %s2080 = scalar_lea.sflag [#allocation6], %s2079
        %s2081 = sand.u32 %s276, 1
        %s2082 = smul.addr %s2081, 8
        %s2083 = scalar_lea.vmem [#allocation15], %s2082
        // Predicated region
        $region89: #{tpu_custom_call.1} parent=59 // pred_check
          %p2084 = pneg %p286
        $region90: #{tpu_custom_call.1} parent=59 // pred_check_branch
          %2086 = sbr.rel (%p2084) target = $region92
        $region91: #{tpu_custom_call.1} parent=59 // pred_region
          %s2088 = ssub.s32 128, 128
          %2089 = vsyncadd %s2080, %s2088
          %s2090 = sadd.s32 %s37, %s36
          %s2091 = smul.addr %s2090, 128
          %s2092 = scalar_lea.hbm %s10, %s2091
          %s2094 = sshll.u32 %s2083, 4
          %s2095 = int_to_ptr.vmem [resolvable:$true] %s2094
          %2097 = dma.vmem_to_hbm [thread:$0]  %s2095, 128, %s2092, %s2080
        $region92: #{tpu_custom_call.1} parent=59 // pred_fallthru
          _
      $region60: #{tpu_custom_call.1} parent=5 // pred_fallthru
        _
      %p2098 = scmp.le.s32.totalorder 2, %s27
      // Predicated region
      $region93: #{tpu_custom_call.1} parent=5 // pred_check
        %p2099 = pneg %p2098
      $region94: #{tpu_custom_call.1} parent=5 // pred_check_branch
        %2101 = sbr.rel (%p2099) target = $region96
      $region95: #{tpu_custom_call.1} parent=5 // pred_region
        %s2102 = ssub.s32 %s27, 2
        // Predicated region
        $region97: #{tpu_custom_call.1} parent=95 // pred_check
          %p2103 = pneg %p292
        $region98: #{tpu_custom_call.1} parent=95 // pred_check_branch
          %2105 = sbr.rel (%p2103) target = $region100
        $region99: #{tpu_custom_call.1} parent=95 // pred_region
          %s2106 = sand.u32 %s277, 1
          %s2107 = scalar_lea.sflag [#allocation6], %s2106
          %s2108 = sand.u32 %s277, 1
          %s2109 = smul.addr %s2108, 8
          %s2110 = scalar_lea.vmem [#allocation15], %s2109
          %2111 = dma.done %s2107, 128
        $region100: #{tpu_custom_call.1} parent=95 // pred_fallthru
          _
      $region96: #{tpu_custom_call.1} parent=5 // pred_fallthru
        _
    $region6: #{tpu_custom_call.1} parent=1 // loop_footer
      %s31 = sadd.s32 1, %s27
    $region7: #{tpu_custom_call.1} parent=1 // loop_footer_branch
      %26 = sbr.rel target = $region3
    $region8: #{tpu_custom_call.1} parent=1 // loop_exit
      _
    %2112 = vsyncpa [#allocation5], 1
    %s2113 = scalar_lea.sflag [#allocation5], 1
    %2114 = vsyncpa %s2113, 1
    %2115 = vsyncpa [#allocation8], 1
    %s2116 = scalar_lea.sflag [#allocation8], 1
    %2117 = vsyncpa %s2116, 1
    %2118 = vsyncpa [#allocation11], 1
    %2119 = vsyncpa [#allocation14], 1
    %2120 = vsyncpa [#allocation6], 1
    %s2121 = scalar_lea.sflag [#allocation6], 1
    %2122 = vsyncpa %s2121, 1

</llo_original>
